<compile_context>
chip_gen: v6e
topology: v6e:2x2x1
jax: 0.10.0
libtpu: 0.0.40
codegen_flags: <defaults>
</compile_context>

<pallas_src>
import functools

import jax
import jax.numpy as jnp
from jax.experimental import pallas as pl
from jax.experimental.pallas import tpu as pltpu


_LN_EPS = 1e-5    # TODO(synk): verify eps against the reference (HF BERT uses 1e-12).
_NEG_INF = -1e9   # large-finite (not -inf): fully padded rows stay finite (no NaN)


# ---------------------------------------------------------------------------
# Device / tiling helpers (generation aware: v5e / v6e / v7x).
# ---------------------------------------------------------------------------

def _device_info():
    kind = ""
    try:
        kind = jax.devices()[0].device_kind.lower()
    except Exception:
        pass
    vmem = None
    try:
        vmem = int(pltpu.get_tpu_info().vmem_capacity_bytes)
    except Exception:
        vmem = None
    if vmem is None:
        # v7x-class parts have 64 MiB VMEM per TensorCore; older parts 128 MiB.
        vmem = (64 << 20) if ("v7" in kind or "7x" in kind) else (128 << 20)
    return kind, vmem


@functools.lru_cache(maxsize=None)
def _tiling():
    kind, vmem = _device_info()
    small_vmem = vmem <= (96 << 20)          # v7x-class (64 MiB physical VMEM)
    if small_vmem:
        max_tq, max_tk = 128, 256            # keep the per-step working set small
    elif "v5" in kind:
        max_tq, max_tk = 256, 512            # v5e: 128-wide MXU, M=256 already fills it
    else:
        max_tq, max_tk = 512, 512            # v6e+: amortize per-step overhead
    vmem_cap = int(vmem * 0.82)              # ~52 MiB on v7x, ~105 MiB on v5e/v6e
    return max_tq, max_tk, vmem_cap


def _pick_tile(S, max_tile):
    if S <= max_tile:
        return S
    for cand in (512, 256, 128, 64, 32, 16, 8):
        if cand <= max_tile and S % cand == 0:
            return cand
    return S   # full extent is always a legal block


def _clamp_vmem(est, cap):
    return int(min(max(int(est), 32 << 20), cap))


_BUFFERED1 = None


def _single_buffer_weights_supported():
    """Probe once (eagerly, tiny shapes) whether pipeline_mode=pl.Buffered(1) lowers."""
    global _BUFFERED1
    if _BUFFERED1 is None:
        try:
            def _probe(w_ref, o_ref):
                o_ref[...] = w_ref[...] + 1.0

            out = pl.pallas_call(
                _probe,
                out_shape=jax.ShapeDtypeStruct((8, 128), jnp.float32),
                grid=(2,),
                in_specs=[pl.BlockSpec((8, 128), lambda i: (0, 0),
                                       pipeline_mode=pl.Buffered(1))],
                out_specs=pl.BlockSpec((8, 128), lambda i: (0, 0)),
            )(jnp.zeros((8, 128), jnp.float32))
            jax.block_until_ready(out)
            _BUFFERED1 = True
        except Exception:
            _BUFFERED1 = False
    return _BUFFERED1


def _weight_spec(shape, single_buffer):
    # constant block index across the whole grid -> double buffering is pure VMEM waste
    index_map = lambda *idx: (0,) * len(shape)
    if single_buffer:
        return pl.BlockSpec(shape, index_map, pipeline_mode=pl.Buffered(1))
    return pl.BlockSpec(shape, index_map)


# ---------------------------------------------------------------------------
# Kernels.
# ---------------------------------------------------------------------------

def _layernorm_f32(x, gamma, beta, eps=_LN_EPS):
    mean = jnp.mean(x, axis=-1, keepdims=True)
    var = jnp.mean((x - mean) ** 2, axis=-1, keepdims=True)
    return (x - mean) * jax.lax.rsqrt(var + eps) * gamma + beta


def qkv_proj_kernel(x_ref, wq_ref, wk_ref, wv_ref, bq_ref, bk_ref, bv_ref,
                    q_ref, k_ref, v_ref):
    """Q/K/V projections for one (batch, sequence-tile); head-major bf16 outputs."""
    f32, bf16 = jnp.float32, jnp.bfloat16
    x = x_ref[0].astype(bf16)                      # (TS, D) — bf16 MXU inputs
    H, dh = q_ref.shape[1], q_ref.shape[3]
    TS = x.shape[0]

    def proj(w_ref, b_ref):
        y = jnp.dot(x, w_ref[...], preferred_element_type=f32) + b_ref[0]
        # (TS, D) -> (H, TS, dh): head-major so the attention kernel never
        # relayouts K/V per query tile.
        return y.astype(bf16).reshape(TS, H, dh).swapaxes(0, 1)

    q_ref[0] = proj(wq_ref, bq_ref)    # 1/sqrt(dh) already folded into wq / bq
    k_ref[0] = proj(wk_ref, bk_ref)
    v_ref[0] = proj(wv_ref, bv_ref)


def attn_ffn_kernel(len_ref,                                 # scalar prefetch (SMEM)
                    xres_ref, q_ref, k_ref, v_ref,           # activations
                    wo_ref, bo_ref, g1_ref, be1_ref,         # attn out proj + LN1
                    w1_ref, b1_ref, w2_ref, b2_ref,          # FFN
                    g2_ref, be2_ref,                         # LN2
                    out_ref,
                    m_scr, l_scr, acc_scr):                  # online-softmax state
    f32, bf16 = jnp.float32, jnp.bfloat16
    b = pl.program_id(0)
    ki = pl.program_id(2)
    n_k = pl.num_programs(2)

    @pl.when(ki == 0)
    def _init():
        m_scr[...] = jnp.full(m_scr.shape, _NEG_INF, f32)
        l_scr[...] = jnp.zeros(l_scr.shape, f32)
        acc_scr[...] = jnp.zeros(acc_scr.shape, f32)

    q = q_ref[0]                                   # (H, TQ, dh) bf16, pre-scaled
    k = k_ref[0]                                   # (H, TK, dh) bf16
    v = v_ref[0]                                   # (H, TK, dh) bf16
    H, TQ, dh = q.shape
    TK = k.shape[1]

    # head-batched score matmul, f32 accumulation
    s = jnp.einsum("hqd,hkd->hqk", q, k, preferred_element_type=f32)   # (H,TQ,TK)

    # key-padding mask rebuilt in-kernel from the per-example valid length
    valid_len = len_ref[b]
    key_pos = ki * TK + jax.lax.broadcasted_iota(jnp.int32, (1, 1, TK), 2)
    s = jnp.where(key_pos < valid_len, s, _NEG_INF)

    # online softmax update (flash-style)
    m_prev = m_scr[...]
    m_new = jnp.maximum(m_prev, jnp.max(s, axis=-1, keepdims=True))
    alpha = jnp.exp(m_prev - m_new)
    p = jnp.exp(s - m_new)
    l_scr[...] = alpha * l_scr[...] + jnp.sum(p, axis=-1, keepdims=True)
    acc_scr[...] = alpha * acc_scr[...] + jnp.einsum(
        "hqk,hkd->hqd", p.astype(bf16), v, preferred_element_type=f32)
    m_scr[...] = m_new

    @pl.when(ki == n_k - 1)
    def _finalize():
        inv_l = pl.reciprocal(l_scr[...], approx=True)                 # EUP slot
        ctx = (acc_scr[...] * inv_l).astype(bf16)                      # (H, TQ, dh)
        ctx = ctx.swapaxes(0, 1).reshape(TQ, H * dh)                   # (TQ, D)
        x = xres_ref[0].astype(f32)                                    # (TQ, D)

        attn = jnp.dot(ctx, wo_ref[...], preferred_element_type=f32) + bo_ref[0]
        h1 = _layernorm_f32(x + attn, g1_ref[0], be1_ref[0])

        # TODO(synk): once D*F bf16 weights exceed ~8 MiB, stream W1/W2 in
        # F-chunks (extra "arbitrary" grid axis or pltpu.emit_pipeline) instead
        # of keeping them fully resident.
        ff = jnp.dot(h1.astype(bf16), w1_ref[...], preferred_element_type=f32) + b1_ref[0]
        ff = jnp.maximum(ff, 0.0)
        ff = jnp.dot(ff.astype(bf16), w2_ref[...], preferred_element_type=f32) + b2_ref[0]
        out = _layernorm_f32(h1 + ff, g2_ref[0], be2_ref[0])
        out_ref[0] = out.astype(out_ref.dtype)


# ---------------------------------------------------------------------------
# pallas_call builders (cached per shape so each kernel compiles once).
# ---------------------------------------------------------------------------

@functools.lru_cache(maxsize=None)
def _build_qkv_call(B, S, D, H, act_dtype_name):
    act = jnp.dtype(act_dtype_name)
    dh = D // H
    _, _, vmem_cap = _tiling()
    TS = _pick_tile(S, 256)
    single = _single_buffer_weights_supported()
    wbuf = 1 if single else 2

    qkv_shape = jax.ShapeDtypeStruct((B, H, S, dh), jnp.bfloat16)

    vmem_est = 2 * (
        wbuf * (3 * D * D * 2 + 3 * D * 4)
        + 2 * TS * D * act.itemsize              # x (double-buffered)
        + 3 * 2 * TS * D * 2                     # q/k/v outputs (double-buffered bf16)
        + 8 * TS * D * 4                         # f32 intermediates / casts
    )
    cost = pl.CostEstimate(
        flops=int(2 * 3 * B * S * D * D),
        transcendentals=0,
        bytes_accessed=int(B * S * D * (act.itemsize + 3 * 2) + 3 * D * D * 2 + 3 * D * 4),
    )

    return pl.pallas_call(
        qkv_proj_kernel,
        out_shape=(qkv_shape, qkv_shape, qkv_shape),
        grid=(B, S // TS),
        in_specs=[
            pl.BlockSpec((1, TS, D), lambda b, si: (b, si, 0)),
            _weight_spec((D, D), single), _weight_spec((D, D), single),
            _weight_spec((D, D), single),
            _weight_spec((1, D), single), _weight_spec((1, D), single),
            _weight_spec((1, D), single),
        ],
        out_specs=(
            pl.BlockSpec((1, H, TS, dh), lambda b, si: (b, 0, si, 0)),
            pl.BlockSpec((1, H, TS, dh), lambda b, si: (b, 0, si, 0)),
            pl.BlockSpec((1, H, TS, dh), lambda b, si: (b, 0, si, 0)),
        ),
        compiler_params=pltpu.CompilerParams(
            dimension_semantics=("parallel", "parallel"),
            vmem_limit_bytes=_clamp_vmem(vmem_est, vmem_cap)),
        cost_estimate=cost,
    )


@functools.lru_cache(maxsize=None)
def _build_attn_ffn_call(B, S, D, F, H, act_dtype_name):
    act = jnp.dtype(act_dtype_name)
    dh = D // H
    max_tq, max_tk, vmem_cap = _tiling()
    TQ = _pick_tile(S, max_tq)
    TK = _pick_tile(S, max_tk)
    n_q, n_k = S // TQ, S // TK
    single = _single_buffer_weights_supported()
    wbuf = 1 if single else 2

    vmem_est = 2 * (
        wbuf * ((D * D + 2 * D * F) * 2 + (6 * D + F) * 4)     # weights + biases/LN
        + 2 * (TQ * D * act.itemsize + 2 * TQ * D * 2          # x residual, q, out
               + 2 * TK * D * 2)                               # k, v chunk (bf16)
        + H * TQ * (dh + 2) * 4                                # online-softmax scratch
        + 3 * H * TQ * TK * 4                                  # scores / probs live set
        + 2 * TQ * F * 4 + 8 * TQ * D * 4                      # FFN + LN intermediates
    )
    cost = pl.CostEstimate(
        flops=int(B * (4 * S * S * D + 2 * S * D * D + 4 * S * D * F)),
        transcendentals=int(2 * B * H * S * S),
        bytes_accessed=int(B * S * D * (act.itemsize + 2 + 2)
                           + B * n_q * 2 * S * D * 2
                           + (D * D + 2 * D * F) * 2 + (6 * D + F) * 4),
    )

    grid_spec = pltpu.PrefetchScalarGridSpec(
        num_scalar_prefetch=1,
        grid=(B, n_q, n_k),
        in_specs=[
            pl.BlockSpec((1, TQ, D), lambda b, qi, ki, lens: (b, qi, 0)),         # x residual
            pl.BlockSpec((1, H, TQ, dh), lambda b, qi, ki, lens: (b, 0, qi, 0)),  # q
            pl.BlockSpec((1, H, TK, dh), lambda b, qi, ki, lens: (b, 0, ki, 0)),  # k chunk
            pl.BlockSpec((1, H, TK, dh), lambda b, qi, ki, lens: (b, 0, ki, 0)),  # v chunk
            _weight_spec((D, D), single), _weight_spec((1, D), single),           # wo, bo
            _weight_spec((1, D), single), _weight_spec((1, D), single),           # ln1 g,b
            _weight_spec((D, F), single), _weight_spec((1, F), single),           # w1, b1
            _weight_spec((F, D), single), _weight_spec((1, D), single),           # w2, b2
            _weight_spec((1, D), single), _weight_spec((1, D), single),           # ln2 g,b
        ],
        out_specs=pl.BlockSpec((1, TQ, D), lambda b, qi, ki, lens: (b, qi, 0)),
        scratch_shapes=[
            pltpu.VMEM((H, TQ, 1), jnp.float32),      # running max
            pltpu.VMEM((H, TQ, 1), jnp.float32),      # running denominator
            pltpu.VMEM((H, TQ, dh), jnp.float32),     # context accumulator
        ],
    )

    return pl.pallas_call(
        attn_ffn_kernel,
        out_shape=jax.ShapeDtypeStruct((B, S, D), act),
        grid_spec=grid_spec,
        compiler_params=pltpu.CompilerParams(
            dimension_semantics=("parallel", "parallel", "arbitrary"),
            vmem_limit_bytes=_clamp_vmem(vmem_est, vmem_cap)),
        cost_estimate=cost,
    )


# ---------------------------------------------------------------------------
# Python wrappers.
# ---------------------------------------------------------------------------

def encoder_layer(x, lengths, p, *, num_heads):
    """One post-LN BERT encoder layer (self-attention + FFN). x: (B, S, D)."""
    B, S, D = x.shape
    F = p["w1"].shape[1]
    dtype_name = jnp.dtype(x.dtype).name
    qkv_call = _build_qkv_call(B, S, D, num_heads, dtype_name)
    attn_call = _build_attn_ffn_call(B, S, D, F, num_heads, dtype_name)

    q, k, v = qkv_call(x, p["wq"], p["wk"], p["wv"], p["bq"], p["bk"], p["bv"])
    return attn_call(lengths, x, q, k, v,
                     p["wo"], p["bo"], p["g1"], p["be1"],
                     p["w1"], p["b1"], p["w2"], p["b2"], p["g2"], p["be2"])


def encoder_forward(x, lengths, params, *, num_heads, compute_dtype=jnp.bfloat16):
    """x: (B, S, D); lengths: (B,) int32 valid (un-padded) lengths, or None.

    TODO(synk): dense additive attn_mask tensors are not supported; the standard
    BERT key-padding mask is rebuilt in-kernel from per-example lengths. Padded
    query rows are computed (over valid keys only) and written; callers must
    ignore them.
    """
    B, S, _ = x.shape
    if lengths is None:
        lengths = jnp.full((B,), S, dtype=jnp.int32)
    lengths = lengths.astype(jnp.int32)

    orig_dtype = x.dtype
    h = x.astype(compute_dtype)    # bf16 activations end-to-end halves HBM traffic
    # TODO(synk): per-layer weight DMA is not overlapped across layers; cross-call
    # weight prefetch (semaphore/VMEM-ref outputs) or 2-layer fusion would hide it on v5e.
    for layer_params in params:
        h = encoder_layer(h, lengths, layer_params, num_heads=num_heads)
    return h.astype(orig_dtype)


def init_encoder_params(key, d_model, num_heads, n_layers, d_ff=None):
    """Random bf16 weights. NOTE: the attention scale 1/sqrt(head_dim) is folded
    into wq/bq here (fold it identically when importing pretrained weights)."""
    if d_ff is None:
        d_ff = 4 * d_model
    dh = d_model // num_heads
    scale = 1.0 / float(dh) ** 0.5
    wdt = jnp.bfloat16    # MXU-native weight dtype
    params = []
    for _ in range(n_layers):
        keys = jax.random.split(key, 7)
        key = keys[0]
        s = 0.02
        p = {
            "wq": (jax.random.normal(keys[1], (d_model, d_model), jnp.float32) * s * scale).astype(wdt),
            "wk": (jax.random.normal(keys[2], (d_model, d_model), jnp.float32) * s).astype(wdt),
            "wv": (jax.random.normal(keys[3], (d_model, d_model), jnp.float32) * s).astype(wdt),
            "wo": (jax.random.normal(keys[4], (d_model, d_model), jnp.float32) * s).astype(wdt),
            "bq": jnp.zeros((1, d_model), jnp.float32) * scale,
            "bk": jnp.zeros((1, d_model), jnp.float32),
            "bv": jnp.zeros((1, d_model), jnp.float32),
            "bo": jnp.zeros((1, d_model), jnp.float32),
            "g1": jnp.ones((1, d_model), jnp.float32),
            "be1": jnp.zeros((1, d_model), jnp.float32),
            "w1": (jax.random.normal(keys[5], (d_model, d_ff), jnp.float32) * s).astype(wdt),
            "b1": jnp.zeros((1, d_ff), jnp.float32),
            "w2": (jax.random.normal(keys[6], (d_ff, d_model), jnp.float32) * s).astype(wdt),
            "b2": jnp.zeros((1, d_model), jnp.float32),
            "g2": jnp.ones((1, d_model), jnp.float32),
            "be2": jnp.zeros((1, d_model), jnp.float32),
        }
        params.append(p)
    return params


if __name__ == "__main__":
    # Small shapes consistent with Encoder(d_model, num_heads, n_layers)
    B, S = 2, 8
    d_model, num_heads, n_layers = 32, 4, 2

    key = jax.random.PRNGKey(0)
    kx, kp = jax.random.split(key)
    x = jax.random.normal(kx, (B, S, d_model), jnp.float32)
    params = init_encoder_params(kp, d_model, num_heads, n_layers)
    lengths = jnp.array([S, S - 3], dtype=jnp.int32)   # exercise the key-padding mask

    out = encoder_forward(x, lengths, params, num_heads=num_heads)
    jax.block_until_ready(out)
    assert out.shape == (B, S, d_model)
    assert out.dtype == x.dtype
    assert bool(jnp.all(jnp.isfinite(out)))
    print("KERNEL_OK")
</pallas_src>

<mosaic_0001>
module attributes {stable_mosaic.version = 11 : i64} {
  func.func @_probe(%arg0: i32, %arg1: memref<8x128xf32, #tpu.memory_space<vmem>>, %arg2: memref<8x128xf32, #tpu.memory_space<vmem>>) attributes {dimension_semantics = [#tpu.dimension_semantics<arbitrary>], iteration_bounds = array<i64: 2>, scalar_prefetch = 0 : i64, scratch_operands = 0 : i64, tpu.core_type = #tpu.core_type<tc>, window_params = [{pipeline_mode = #tpu.pipeline_mode<synchronous>, transform_indices = @transform_0, window_bounds = array<i64: 8, 128>}, {pipeline_mode = #tpu.pipeline_mode<synchronous>, transform_indices = @transform_1, window_bounds = array<i64: 8, 128>}]} {
    %c0 = arith.constant 0 : index
    %c0_0 = arith.constant 0 : index
    %0 = vector.load %arg1[%c0, %c0_0] : memref<8x128xf32, #tpu.memory_space<vmem>>, vector<8x128xf32>
    %cst = arith.constant 1.000000e+00 : f32
    %1 = vector.broadcast %cst : f32 to vector<8x128xf32>
    %2 = arith.addf %0, %1 : vector<8x128xf32>
    %c0_1 = arith.constant 0 : index
    %c0_2 = arith.constant 0 : index
    %3 = vector.load %arg2[%c0_1, %c0_2] : memref<8x128xf32, #tpu.memory_space<vmem>>, vector<8x128xf32>
    tpu.vector_store %arg2[%c0_1, %c0_2], %2 {strides = array<i32>} : memref<8x128xf32, #tpu.memory_space<vmem>>, vector<8x128xf32>,
    return
  }
  func.func @transform_0(%arg0: i32) -> (i32, i32) {
    %c0_i32 = arith.constant 0 : i32
    %c0_i32_0 = arith.constant 0 : i32
    %c0_i32_1 = arith.constant 0 : i32
    return %c0_i32, %c0_i32_0 : i32, i32
  }
  func.func @transform_1(%arg0: i32) -> (i32, i32) {
    %c0_i32 = arith.constant 0 : i32
    %c0_i32_0 = arith.constant 0 : i32
    %c0_i32_1 = arith.constant 0 : i32
    return %c0_i32, %c0_i32_0 : i32, i32
  }
}

module attributes {stable_mosaic.version = 11 : i64} {
  func.func @qkv_proj_kernel(%arg0: i32, %arg1: i32, %arg2: memref<1x8x32xbf16, #tpu.memory_space<vmem>>, %arg3: memref<32x32xbf16, #tpu.memory_space<vmem>>, %arg4: memref<32x32xbf16, #tpu.memory_space<vmem>>, %arg5: memref<32x32xbf16, #tpu.memory_space<vmem>>, %arg6: memref<1x32xf32, #tpu.memory_space<vmem>>, %arg7: memref<1x32xf32, #tpu.memory_space<vmem>>, %arg8: memref<1x32xf32, #tpu.memory_space<vmem>>, %arg9: memref<1x4x8x8xbf16, #tpu.memory_space<vmem>>, %arg10: memref<1x4x8x8xbf16, #tpu.memory_space<vmem>>, %arg11: memref<1x4x8x8xbf16, #tpu.memory_space<vmem>>) attributes {dimension_semantics = [#tpu.dimension_semantics<parallel>, #tpu.dimension_semantics<parallel>], iteration_bounds = array<i64: 2, 1>, scalar_prefetch = 0 : i64, scratch_operands = 0 : i64, tpu.core_type = #tpu.core_type<tc>, window_params = [{transform_indices = @transform_0, window_bounds = array<i64: 1, 8, 32>}, {pipeline_mode = #tpu.pipeline_mode<synchronous>, transform_indices = @transform_1, window_bounds = array<i64: 32, 32>}, {pipeline_mode = #tpu.pipeline_mode<synchronous>, transform_indices = @transform_2, window_bounds = array<i64: 32, 32>}, {pipeline_mode = #tpu.pipeline_mode<synchronous>, transform_indices = @transform_3, window_bounds = array<i64: 32, 32>}, {pipeline_mode = #tpu.pipeline_mode<synchronous>, transform_indices = @transform_4, window_bounds = array<i64: 1, 32>}, {pipeline_mode = #tpu.pipeline_mode<synchronous>, transform_indices = @transform_5, window_bounds = array<i64: 1, 32>}, {pipeline_mode = #tpu.pipeline_mode<synchronous>, transform_indices = @transform_6, window_bounds = array<i64: 1, 32>}, {transform_indices = @transform_7, window_bounds = array<i64: 1, 4, 8, 8>}, {transform_indices = @transform_8, window_bounds = array<i64: 1, 4, 8, 8>}, {transform_indices = @transform_9, window_bounds = array<i64: 1, 4, 8, 8>}]} {
    %c0 = arith.constant 0 : index
    %c0_0 = arith.constant 0 : index
    %c0_1 = arith.constant 0 : index
    %0 = vector.load %arg2[%c0, %c0_0, %c0_1] : memref<1x8x32xbf16, #tpu.memory_space<vmem>>, vector<1x8x32xbf16>
    %1 = vector.shape_cast %0 : vector<1x8x32xbf16> to vector<8x32xbf16>
    %c0_2 = arith.constant 0 : index
    %c0_3 = arith.constant 0 : index
    %2 = vector.load %arg3[%c0_2, %c0_3] : memref<32x32xbf16, #tpu.memory_space<vmem>>, vector<32x32xbf16>
    %cst = arith.constant dense<0.000000e+00> : vector<8x32xf32>
    %3 = tpu.matmul %1, %2, %cst {dimension_numbers = #tpu.dot_dimension_numbers<[1], [0], [0], [1], [0, 0, 1, 1], [], []>} : vector<8x32xbf16>, vector<32x32xbf16>, vector<8x32xf32> -> vector<8x32xf32>
    %c0_4 = arith.constant 0 : index
    %c0_5 = arith.constant 0 : index
    %4 = vector.load %arg6[%c0_4, %c0_5] : memref<1x32xf32, #tpu.memory_space<vmem>>, vector<1x32xf32>
    %5 = vector.shape_cast %4 : vector<1x32xf32> to vector<32xf32>
    %6 = vector.shape_cast %5 : vector<32xf32> to vector<1x32xf32>
    %7 = vector.broadcast %6 : vector<1x32xf32> to vector<8x32xf32>
    %8 = arith.addf %3, %7 : vector<8x32xf32>
    %9 = arith.truncf %8 : vector<8x32xf32> to vector<8x32xbf16>
    %10 = vector.shape_cast %9 : vector<8x32xbf16> to vector<8x4x8xbf16>
    %11 = tpu.transpose %10, [1, 0, 2] : vector<8x4x8xbf16> -> vector<4x8x8xbf16>
    %c0_6 = arith.constant 0 : index
    %c0_7 = arith.constant 0 : index
    %c0_8 = arith.constant 0 : index
    %c0_9 = arith.constant 0 : index
    %12 = vector.load %arg9[%c0_6, %c0_7, %c0_8, %c0_9] : memref<1x4x8x8xbf16, #tpu.memory_space<vmem>>, vector<1x4x8x8xbf16>
    %13 = vector.shape_cast %12 : vector<1x4x8x8xbf16> to vector<4x8x8xbf16>
    %14 = vector.shape_cast %11 : vector<4x8x8xbf16> to vector<1x4x8x8xbf16>
    tpu.vector_store %arg9[%c0_6, %c0_7, %c0_8, %c0_9], %14 {strides = array<i32>} : memref<1x4x8x8xbf16, #tpu.memory_space<vmem>>, vector<1x4x8x8xbf16>,
    %c0_10 = arith.constant 0 : index
    %c0_11 = arith.constant 0 : index
    %15 = vector.load %arg4[%c0_10, %c0_11] : memref<32x32xbf16, #tpu.memory_space<vmem>>, vector<32x32xbf16>
    %cst_12 = arith.constant dense<0.000000e+00> : vector<8x32xf32>
    %16 = tpu.matmul %1, %15, %cst_12 {dimension_numbers = #tpu.dot_dimension_numbers<[1], [0], [0], [1], [0, 0, 1, 1], [], []>} : vector<8x32xbf16>, vector<32x32xbf16>, vector<8x32xf32> -> vector<8x32xf32>
    %c0_13 = arith.constant 0 : index
    %c0_14 = arith.constant 0 : index
    %17 = vector.load %arg7[%c0_13, %c0_14] : memref<1x32xf32, #tpu.memory_space<vmem>>, vector<1x32xf32>
    %18 = vector.shape_cast %17 : vector<1x32xf32> to vector<32xf32>
    %19 = vector.shape_cast %18 : vector<32xf32> to vector<1x32xf32>
    %20 = vector.broadcast %19 : vector<1x32xf32> to vector<8x32xf32>
    %21 = arith.addf %16, %20 : vector<8x32xf32>
    %22 = arith.truncf %21 : vector<8x32xf32> to vector<8x32xbf16>
    %23 = vector.shape_cast %22 : vector<8x32xbf16> to vector<8x4x8xbf16>
    %24 = tpu.transpose %23, [1, 0, 2] : vector<8x4x8xbf16> -> vector<4x8x8xbf16>
    %c0_15 = arith.constant 0 : index
    %c0_16 = arith.constant 0 : index
    %c0_17 = arith.constant 0 : index
    %c0_18 = arith.constant 0 : index
    %25 = vector.load %arg10[%c0_15, %c0_16, %c0_17, %c0_18] : memref<1x4x8x8xbf16, #tpu.memory_space<vmem>>, vector<1x4x8x8xbf16>
    %26 = vector.shape_cast %25 : vector<1x4x8x8xbf16> to vector<4x8x8xbf16>
    %27 = vector.shape_cast %24 : vector<4x8x8xbf16> to vector<1x4x8x8xbf16>
    tpu.vector_store %arg10[%c0_15, %c0_16, %c0_17, %c0_18], %27 {strides = array<i32>} : memref<1x4x8x8xbf16, #tpu.memory_space<vmem>>, vector<1x4x8x8xbf16>,
    %c0_19 = arith.constant 0 : index
    %c0_20 = arith.constant 0 : index
    %28 = vector.load %arg5[%c0_19, %c0_20] : memref<32x32xbf16, #tpu.memory_space<vmem>>, vector<32x32xbf16>
    %cst_21 = arith.constant dense<0.000000e+00> : vector<8x32xf32>
    %29 = tpu.matmul %1, %28, %cst_21 {dimension_numbers = #tpu.dot_dimension_numbers<[1], [0], [0], [1], [0, 0, 1, 1], [], []>} : vector<8x32xbf16>, vector<32x32xbf16>, vector<8x32xf32> -> vector<8x32xf32>
    %c0_22 = arith.constant 0 : index
    %c0_23 = arith.constant 0 : index
    %30 = vector.load %arg8[%c0_22, %c0_23] : memref<1x32xf32, #tpu.memory_space<vmem>>, vector<1x32xf32>
    %31 = vector.shape_cast %30 : vector<1x32xf32> to vector<32xf32>
    %32 = vector.shape_cast %31 : vector<32xf32> to vector<1x32xf32>
    %33 = vector.broadcast %32 : vector<1x32xf32> to vector<8x32xf32>
    %34 = arith.addf %29, %33 : vector<8x32xf32>
    %35 = arith.truncf %34 : vector<8x32xf32> to vector<8x32xbf16>
    %36 = vector.shape_cast %35 : vector<8x32xbf16> to vector<8x4x8xbf16>
    %37 = tpu.transpose %36, [1, 0, 2] : vector<8x4x8xbf16> -> vector<4x8x8xbf16>
    %c0_24 = arith.constant 0 : index
    %c0_25 = arith.constant 0 : index
    %c0_26 = arith.constant 0 : index
    %c0_27 = arith.constant 0 : index
    %38 = vector.load %arg11[%c0_24, %c0_25, %c0_26, %c0_27] : memref<1x4x8x8xbf16, #tpu.memory_space<vmem>>, vector<1x4x8x8xbf16>
    %39 = vector.shape_cast %38 : vector<1x4x8x8xbf16> to vector<4x8x8xbf16>
    %40 = vector.shape_cast %37 : vector<4x8x8xbf16> to vector<1x4x8x8xbf16>
    tpu.vector_store %arg11[%c0_24, %c0_25, %c0_26, %c0_27], %40 {strides = array<i32>} : memref<1x4x8x8xbf16, #tpu.memory_space<vmem>>, vector<1x4x8x8xbf16>,
    return
  }
  func.func @transform_0(%arg0: i32, %arg1: i32) -> (i32, i32, i32) {
    %c0_i32 = arith.constant 0 : i32
    %c0_i32_0 = arith.constant 0 : i32
    return %arg0, %arg1, %c0_i32 : i32, i32, i32
  }
  func.func @transform_1(%arg0: i32, %arg1: i32) -> (i32, i32) {
    %c0_i32 = arith.constant 0 : i32
    %c0_i32_0 = arith.constant 0 : i32
    %c0_i32_1 = arith.constant 0 : i32
    return %c0_i32, %c0_i32_0 : i32, i32
  }
  func.func @transform_2(%arg0: i32, %arg1: i32) -> (i32, i32) {
    %c0_i32 = arith.constant 0 : i32
    %c0_i32_0 = arith.constant 0 : i32
    %c0_i32_1 = arith.constant 0 : i32
    return %c0_i32, %c0_i32_0 : i32, i32
  }
  func.func @transform_3(%arg0: i32, %arg1: i32) -> (i32, i32) {
    %c0_i32 = arith.constant 0 : i32
    %c0_i32_0 = arith.constant 0 : i32
    %c0_i32_1 = arith.constant 0 : i32
    return %c0_i32, %c0_i32_0 : i32, i32
  }
  func.func @transform_4(%arg0: i32, %arg1: i32) -> (i32, i32) {
    %c0_i32 = arith.constant 0 : i32
    %c0_i32_0 = arith.constant 0 : i32
    %c0_i32_1 = arith.constant 0 : i32
    return %c0_i32, %c0_i32_0 : i32, i32
  }
  func.func @transform_5(%arg0: i32, %arg1: i32) -> (i32, i32) {
    %c0_i32 = arith.constant 0 : i32
    %c0_i32_0 = arith.constant 0 : i32
    %c0_i32_1 = arith.constant 0 : i32
    return %c0_i32, %c0_i32_0 : i32, i32
  }
  func.func @transform_6(%arg0: i32, %arg1: i32) -> (i32, i32) {
    %c0_i32 = arith.constant 0 : i32
    %c0_i32_0 = arith.constant 0 : i32
    %c0_i32_1 = arith.constant 0 : i32
    return %c0_i32, %c0_i32_0 : i32, i32
  }
  func.func @transform_7(%arg0: i32, %arg1: i32) -> (i32, i32, i32, i32) {
    %c0_i32 = arith.constant 0 : i32
    %c0_i32_0 = arith.constant 0 : i32
    %c0_i32_1 = arith.constant 0 : i32
    return %arg0, %c0_i32, %arg1, %c0_i32_0 : i32, i32, i32, i32
  }
  func.func @transform_8(%arg0: i32, %arg1: i32) -> (i32, i32, i32, i32) {
    %c0_i32 = arith.constant 0 : i32
    %c0_i32_0 = arith.constant 0 : i32
    %c0_i32_1 = arith.constant 0 : i32
    return %arg0, %c0_i32, %arg1, %c0_i32_0 : i32, i32, i32, i32
  }
  func.func @transform_9(%arg0: i32, %arg1: i32) -> (i32, i32, i32, i32) {
    %c0_i32 = arith.constant 0 : i32
    %c0_i32_0 = arith.constant 0 : i32
    %c0_i32_1 = arith.constant 0 : i32
    return %arg0, %c0_i32, %arg1, %c0_i32_0 : i32, i32, i32, i32
  }
}

</mosaic_0001>

<llo_original>
// kernel: tpu_custom_call.1
$region0: #{tpu_custom_call.1}
  #allocation0 [shape = 'u32[]', space=smem, size = 0x4, offset = 0x4, fixed_abs, tag = 'smem constant byte address 0x4 - core index']
  #allocation1 [shape = 'u32[144,128]{1,0:T(1,128)}', space=vmem, size = 0x12000, scoped, tag = 'internal scratch']
  %s0 = inlined_call_operand.hbm [shape: f32[8,128], index: 0, kind: input, shape index: {}]
  %s1 = inlined_call_operand.hbm [shape: f32[8,128], index: 1, kind: output, shape index: {}]
  %s2 = sld [smem:[#allocation0]]
  $region41: #{tpu_custom_call.1} parent=0
    _
  %s4 = ssub.s32 1, %s2
  %s5 = scalar_select 0, %s4, %s2
  $region1: #{tpu_custom_call.1} parent=0
    #allocation2 [shape = 'u8[4096]{0}', space=vmem, size = 0x1000, scoped, tag = 'input window, operand 0, single buffered']
    #allocation3 [shape = 's32[2]{0}', space=sflag, size = 0x8, scoped, tag = 'scoped memory for tpu_custom_call.1']
    #allocation4 [shape = 's32[2]{0}', space=sflag, size = 0x8, scoped, tag = 'scoped memory for tpu_custom_call.1']
    #allocation5 [shape = 'u8[4096]{0}', space=vmem, size = 0x1000, scoped, tag = 'output window, operand 0, single buffered']
    %6 = vsyncpa [#allocation3], 0
    %7 = vsyncpa [#allocation4], 0
    loop: start=0, step=1, limit=4
    $region2: #{tpu_custom_call.1} parent=1 // loop_pre_header
      _
    $region3: #{tpu_custom_call.1} parent=1 // loop_header
      %s9 = sphi 0, %s13
      %p10 = scmp.ge.s32.totalorder %s9, 4
      %s17 = sphi 0, %s17
      %s19 = sphi 0, %s17
      %s20 = sphi 0, %s19
      %s34 = sphi 0, %s20
      %s38 = sphi 0, %s38
      %s40 = sphi 0, %s38
      %s41 = sphi 0, %s40
      %s55 = sphi 0, %s41
    $region4: #{tpu_custom_call.1} parent=1 // loop_header_branch
      %12 = sbr.rel (%p10) target = $region8
    $region5: #{tpu_custom_call.1} parent=1 // loop_body
      %s14 = ssub.s32 %s9, 1
      %s15 = ssub.s32 %s9, 2
      %s16 = sadd.s32 %s9, 1
      %s18 = sadd.s32 %s17, 1
      %p21 = scmp.eq.s32.totalorder %s9, 1
      %p22 = scmp.ne.s32.totalorder %s17, %s19
      %p23 = scmp.eq.s32.totalorder %s9, 0
      %p24 = por %p22, %p23
      %p25 = scmp.ne.s32.totalorder %s17, %s19
      %p26 = scmp.eq.s32.totalorder %s14, 1
      %p27 = por %p25, %p26
      %p28 = scmp.ne.s32.totalorder %s19, %s20
      %p29 = scmp.eq.s32.totalorder %s14, 0
      %p30 = por %p28, %p29
      %p31 = scmp.ne.s32.totalorder %s19, %s20
      %p32 = scmp.eq.s32.totalorder %s15, 1
      %p33 = por %p31, %p32
      %p35 = scmp.ne.s32.totalorder %s20, %s34
      %p36 = scmp.eq.s32.totalorder %s15, 0
      %p37 = por %p35, %p36
      %s39 = sadd.s32 %s38, 1
      %p42 = scmp.eq.s32.totalorder %s9, 1
      %p43 = scmp.ne.s32.totalorder %s38, %s40
      %p44 = scmp.eq.s32.totalorder %s9, 0
      %p45 = por %p43, %p44
      %p46 = scmp.ne.s32.totalorder %s38, %s40
      %p47 = scmp.eq.s32.totalorder %s14, 1
      %p48 = por %p46, %p47
      %p49 = scmp.ne.s32.totalorder %s40, %s41
      %p50 = scmp.eq.s32.totalorder %s14, 0
      %p51 = por %p49, %p50
      %p52 = scmp.ne.s32.totalorder %s40, %s41
      %p53 = scmp.eq.s32.totalorder %s15, 1
      %p54 = por %p52, %p53
      %p56 = scmp.ne.s32.totalorder %s41, %s55
      %p57 = scmp.eq.s32.totalorder %s15, 0
      %p58 = por %p56, %p57
      %p59 = scmp.le.s32.totalorder 1, %s9
      %p60 = scmp.lt.s32.totalorder %s9, 3
      %p61 = pnand %p59, %p60
      %p62 = pneg %p61
      // Predicated region
      $region9: #{tpu_custom_call.1} parent=5 // pred_check
        _
      $region10: #{tpu_custom_call.1} parent=5 // pred_check_branch
        %64 = sbr.rel (%p61) target = $region12
      $region11: #{tpu_custom_call.1} parent=5 // pred_region
        %s65 = ssub.s32 %s9, 1
        // Predicated region
        $region13: #{tpu_custom_call.1} parent=11 // pred_check
          %p66 = pneg %p30
        $region14: #{tpu_custom_call.1} parent=11 // pred_check_branch
          %68 = sbr.rel (%p66) target = $region16
        $region15: #{tpu_custom_call.1} parent=11 // pred_region
          %s70 = ssub.s32 128, 128
          %71 = vsyncadd [#allocation3], %s70
          %s73 = sshll.u32 [#allocation2], 4
          %s74 = int_to_ptr.vmem [resolvable:$true] %s73
          %76 = dma.hbm_to_vmem [thread:$0]  %s0, 128, %s74, [#allocation3]
        $region16: #{tpu_custom_call.1} parent=11 // pred_fallthru
          _
      $region12: #{tpu_custom_call.1} parent=5 // pred_fallthru
        _
      %p77 = scmp.lt.s32.totalorder %s9, 2
      // Predicated region
      $region17: #{tpu_custom_call.1} parent=5 // pred_check
        %p78 = pneg %p77
      $region18: #{tpu_custom_call.1} parent=5 // pred_check_branch
        %80 = sbr.rel (%p78) target = $region20
      $region19: #{tpu_custom_call.1} parent=5 // pred_region
        _
      $region20: #{tpu_custom_call.1} parent=5 // pred_fallthru
        _
      %p81 = scmp.le.s32.totalorder 1, %s9
      %p82 = scmp.lt.s32.totalorder %s9, 3
      %p83 = pnand %p81, %p82
      %p84 = pneg %p83
      // Predicated region
      $region21: #{tpu_custom_call.1} parent=5 // pred_check
        _
      $region22: #{tpu_custom_call.1} parent=5 // pred_check_branch
        %86 = sbr.rel (%p83) target = $region24
      $region23: #{tpu_custom_call.1} parent=5 // pred_region
        %s87 = ssub.s32 %s9, 1
        // Predicated region
        $region25: #{tpu_custom_call.1} parent=23 // pred_check
          %p88 = pneg %p30
        $region26: #{tpu_custom_call.1} parent=23 // pred_check_branch
          %90 = sbr.rel (%p88) target = $region28
        $region27: #{tpu_custom_call.1} parent=23 // pred_region
          %91 = dma.done [#allocation3], 128
        $region28: #{tpu_custom_call.1} parent=23 // pred_fallthru
          _
        %p92 = pneg %p30
        %p93 = pneg %p27
        %p94 = pneg %p51
        %p95 = pneg %p48
        %v96 = vld [vmem:[#allocation2] sm:$0xff]
        %v97 = vadd.f32 %v96, 1.0
        %98 = vst [vmem:[#allocation5] sm:$0xff] %v97
        // Predicated region
        $region29: #{tpu_custom_call.1} parent=23 // pred_check
          %p99 = pneg %p48
        $region30: #{tpu_custom_call.1} parent=23 // pred_check_branch
          %101 = sbr.rel (%p99) target = $region32
        $region31: #{tpu_custom_call.1} parent=23 // pred_region
          %s103 = ssub.s32 128, 128
          %104 = vsyncadd [#allocation4], %s103
          %s106 = sshll.u32 [#allocation5], 4
          %s107 = int_to_ptr.vmem [resolvable:$true] %s106
          %109 = dma.vmem_to_hbm [thread:$0]  %s107, 128, %s1, [#allocation4]
        $region32: #{tpu_custom_call.1} parent=23 // pred_fallthru
          _
        // Predicated region
        $region33: #{tpu_custom_call.1} parent=23 // pred_check
          %p110 = pneg %p48
        $region34: #{tpu_custom_call.1} parent=23 // pred_check_branch
          %112 = sbr.rel (%p110) target = $region36
        $region35: #{tpu_custom_call.1} parent=23 // pred_region
          %113 = dma.done [#allocation4], 128
        $region36: #{tpu_custom_call.1} parent=23 // pred_fallthru
          _
      $region24: #{tpu_custom_call.1} parent=5 // pred_fallthru
        _
      %p114 = scmp.le.s32.totalorder 2, %s9
      // Predicated region
      $region37: #{tpu_custom_call.1} parent=5 // pred_check
        %p115 = pneg %p114
      $region38: #{tpu_custom_call.1} parent=5 // pred_check_branch
        %117 = sbr.rel (%p115) target = $region40
      $region39: #{tpu_custom_call.1} parent=5 // pred_region
        %s118 = ssub.s32 %s9, 2
      $region40: #{tpu_custom_call.1} parent=5 // pred_fallthru
        _
    $region6: #{tpu_custom_call.1} parent=1 // loop_footer
      %s13 = sadd.s32 1, %s9
    $region7: #{tpu_custom_call.1} parent=1 // loop_footer_branch
      %8 = sbr.rel target = $region3
    $region8: #{tpu_custom_call.1} parent=1 // loop_exit
      _
    %119 = vsyncpa [#allocation3], 1
    %s120 = scalar_lea.sflag [#allocation3], 1
    %121 = vsyncpa %s120, 1
    %122 = vsyncpa [#allocation4], 1
    %s123 = scalar_lea.sflag [#allocation4], 1
    %124 = vsyncpa %s123, 1

// kernel: tpu_custom_call.1
$region0: #{tpu_custom_call.1}
  #allocation0 [shape = 'u32[]', space=smem, size = 0x4, offset = 0x4, fixed_abs, tag = 'smem constant byte address 0x4 - core index']
  #allocation1 [shape = 'u32[144,128]{1,0:T(1,128)}', space=vmem, size = 0x12000, scoped, tag = 'internal scratch']
  %s0 = inlined_call_operand.hbm [shape: bf16[2,8,32], index: 0, kind: input, shape index: {}]
  %s1 = inlined_call_operand.hbm [shape: bf16[32,32], index: 1, kind: input, shape index: {}]
  %s2 = inlined_call_operand.hbm [shape: bf16[32,32], index: 2, kind: input, shape index: {}]
  %s3 = inlined_call_operand.hbm [shape: bf16[32,32], index: 3, kind: input, shape index: {}]
  %s4 = inlined_call_operand.vmem [shape: f32[1,32], index: 4, kind: input, shape index: {}]
  %s5 = inlined_call_operand.vmem [shape: f32[1,32], index: 5, kind: input, shape index: {}]
  %s6 = inlined_call_operand.vmem [shape: f32[1,32], index: 6, kind: input, shape index: {}]
  %s7 = inlined_call_operand.hbm [shape: bf16[2,4,8,8], index: 7, kind: output, shape index: {0}]
  %s8 = inlined_call_operand.hbm [shape: bf16[2,4,8,8], index: 8, kind: output, shape index: {1}]
  %s9 = inlined_call_operand.hbm [shape: bf16[2,4,8,8], index: 9, kind: output, shape index: {2}]
  %10 = xla_tuple %s7, %s8, %s9
  %s11 = sld [smem:[#allocation0]]
  $region93: #{tpu_custom_call.1} parent=0
    _
  %s13 = ssub.s32 1, %s11
  %s14 = scalar_select 0, %s13, %s11
  $region1: #{tpu_custom_call.1} parent=0
    #allocation2 [shape = 'u8[4096]{0}', space=vmem, size = 0x1000, scoped, tag = 'input window, operand 0']
    #allocation3 [shape = 's32[2]{0}', space=sflag, size = 0x8, scoped, tag = 'scoped memory for tpu_custom_call.1']
    #allocation4 [shape = 's32[2]{0}', space=sflag, size = 0x8, scoped, tag = 'scoped memory for tpu_custom_call.1']
    #allocation5 [shape = 'u8[8192]{0}', space=vmem, size = 0x2000, scoped, tag = 'input window, operand 1, single buffered']
    #allocation6 [shape = 's32[1]{0}', space=sflag, size = 0x4, scoped, tag = 'scoped memory for tpu_custom_call.1']
    #allocation7 [shape = 'u8[8192]{0}', space=vmem, size = 0x2000, scoped, tag = 'input window, operand 2, single buffered']
    #allocation8 [shape = 'u8[8192]{0}', space=vmem, size = 0x2000, scoped, tag = 'input window, operand 3, single buffered']
    #allocation9 [shape = 's32[1]{0}', space=sflag, size = 0x4, scoped, tag = 'scoped memory for tpu_custom_call.1']
    #allocation10 [shape = 'u8[16384]{0}', space=vmem, size = 0x4000, scoped, tag = 'output window, operand 0']
    #allocation11 [shape = 'u8[16384]{0}', space=vmem, size = 0x4000, scoped, tag = 'output window, operand 1']
    #allocation12 [shape = 's32[2]{0}', space=sflag, size = 0x8, scoped, tag = 'scoped memory for tpu_custom_call.1']
    #allocation13 [shape = 'u8[16384]{0}', space=vmem, size = 0x4000, scoped, tag = 'output window, operand 2']
    %15 = vsyncpa [#allocation3], 0
    %s16 = scalar_lea.sflag [#allocation3], 1
    %17 = vsyncpa %s16, 0
    %18 = vsyncpa [#allocation6], 0
    %19 = vsyncpa [#allocation9], 0
    %20 = vsyncpa [#allocation4], 0
    %s21 = scalar_lea.sflag [#allocation4], 1
    %22 = vsyncpa %s21, 0
    %23 = vsyncpa [#allocation12], 0
    %s24 = scalar_lea.sflag [#allocation12], 1
    %25 = vsyncpa %s24, 0
    loop: start=0, step=1, limit=4
    $region2: #{tpu_custom_call.1} parent=1 // loop_pre_header
      _
    $region3: #{tpu_custom_call.1} parent=1 // loop_header
      %s27 = sphi 0, %s31
      %p28 = scmp.ge.s32.totalorder %s27, 4
      %s34 = sphi 0, %s46
      %s35 = sphi 0, %s42
      %s36 = sphi 0, %s34
      %s37 = sphi 0, %s35
      %s38 = sphi 0, %s36
      %s39 = sphi 0, %s37
      %s51 = sphi 0, %s53
      %s54 = sphi 0, %s51
      %s55 = sphi 0, %s54
      %s71 = sphi 0, %s55
      %s75 = sphi 0, %s75
      %s77 = sphi 0, %s75
      %s78 = sphi 0, %s77
      %s92 = sphi 0, %s78
      %s96 = sphi 0, %s96
      %s98 = sphi 0, %s96
      %s99 = sphi 0, %s98
      %s113 = sphi 0, %s99
      %s117 = sphi 0, %s117
      %s119 = sphi 0, %s117
      %s120 = sphi 0, %s119
      %s134 = sphi 0, %s120
      %s138 = sphi 0, %s138
      %s140 = sphi 0, %s138
      %s141 = sphi 0, %s140
      %s155 = sphi 0, %s141
      %s159 = sphi 0, %s159
      %s161 = sphi 0, %s159
      %s162 = sphi 0, %s161
      %s176 = sphi 0, %s162
      %s180 = sphi 0, %s180
      %s182 = sphi 0, %s180
      %s183 = sphi 0, %s182
      %s197 = sphi 0, %s183
      %s205 = sphi 0, %s207
      %s208 = sphi 0, %s205
      %s209 = sphi 0, %s208
      %s225 = sphi 0, %s209
      %s233 = sphi 0, %s235
      %s236 = sphi 0, %s233
      %s237 = sphi 0, %s236
      %s253 = sphi 0, %s237
      %s261 = sphi 0, %s263
      %s264 = sphi 0, %s261
      %s265 = sphi 0, %s264
      %s281 = sphi 0, %s265
    $region4: #{tpu_custom_call.1} parent=1 // loop_header_branch
      %30 = sbr.rel (%p28) target = $region8
    $region5: #{tpu_custom_call.1} parent=1 // loop_body
      %s32 = ssub.s32 %s27, 1
      %s33 = ssub.s32 %s27, 2
      %s40 = sadd.s32 1, %s35
      %p41 = scmp.ge.s32.totalorder %s40, 1
      %s42 = scalar_select %p41, 0, %s40
      %s43 = sadd.s32 1, %s34
      %s44 = scalar_select %p41, %s43, %s34
      %p45 = scmp.ge.s32.totalorder %s44, 2
      %s46 = scalar_select %p45, 0, %s44
      %s47 = ssub.s32 %s34, %s46
      %s48 = ssub.s32 %s35, %s42
      %s49 = sor.u32 %s47, %s48
      %p50 = scmp.eq.s32.totalorder %s49, 0
      %s52 = sadd.s32 %s51, 1
      %s53 = scalar_select %p50, %s51, %s52
      %p56 = pneg %p50
      %p57 = scmp.eq.s32.totalorder %s27, 1
      %p58 = por %p56, %p57
      %p59 = scmp.ne.s32.totalorder %s51, %s54
      %p60 = scmp.eq.s32.totalorder %s27, 0
      %p61 = por %p59, %p60
      %p62 = scmp.ne.s32.totalorder %s51, %s54
      %p63 = scmp.eq.s32.totalorder %s32, 1
      %p64 = por %p62, %p63
      %p65 = scmp.ne.s32.totalorder %s54, %s55
      %p66 = scmp.eq.s32.totalorder %s32, 0
      %p67 = por %p65, %p66
      %p68 = scmp.ne.s32.totalorder %s54, %s55
      %p69 = scmp.eq.s32.totalorder %s33, 1
      %p70 = por %p68, %p69
      %p72 = scmp.ne.s32.totalorder %s55, %s71
      %p73 = scmp.eq.s32.totalorder %s33, 0
      %p74 = por %p72, %p73
      %s76 = sadd.s32 %s75, 1
      %p79 = scmp.eq.s32.totalorder %s27, 1
      %p80 = scmp.ne.s32.totalorder %s75, %s77
      %p81 = scmp.eq.s32.totalorder %s27, 0
      %p82 = por %p80, %p81
      %p83 = scmp.ne.s32.totalorder %s75, %s77
      %p84 = scmp.eq.s32.totalorder %s32, 1
      %p85 = por %p83, %p84
      %p86 = scmp.ne.s32.totalorder %s77, %s78
      %p87 = scmp.eq.s32.totalorder %s32, 0
      %p88 = por %p86, %p87
      %p89 = scmp.ne.s32.totalorder %s77, %s78
      %p90 = scmp.eq.s32.totalorder %s33, 1
      %p91 = por %p89, %p90
      %p93 = scmp.ne.s32.totalorder %s78, %s92
      %p94 = scmp.eq.s32.totalorder %s33, 0
      %p95 = por %p93, %p94
      %s97 = sadd.s32 %s96, 1
      %p100 = scmp.eq.s32.totalorder %s27, 1
      %p101 = scmp.ne.s32.totalorder %s96, %s98
      %p102 = scmp.eq.s32.totalorder %s27, 0
      %p103 = por %p101, %p102
      %p104 = scmp.ne.s32.totalorder %s96, %s98
      %p105 = scmp.eq.s32.totalorder %s32, 1
      %p106 = por %p104, %p105
      %p107 = scmp.ne.s32.totalorder %s98, %s99
      %p108 = scmp.eq.s32.totalorder %s32, 0
      %p109 = por %p107, %p108
      %p110 = scmp.ne.s32.totalorder %s98, %s99
      %p111 = scmp.eq.s32.totalorder %s33, 1
      %p112 = por %p110, %p111
      %p114 = scmp.ne.s32.totalorder %s99, %s113
      %p115 = scmp.eq.s32.totalorder %s33, 0
      %p116 = por %p114, %p115
      %s118 = sadd.s32 %s117, 1
      %p121 = scmp.eq.s32.totalorder %s27, 1
      %p122 = scmp.ne.s32.totalorder %s117, %s119
      %p123 = scmp.eq.s32.totalorder %s27, 0
      %p124 = por %p122, %p123
      %p125 = scmp.ne.s32.totalorder %s117, %s119
      %p126 = scmp.eq.s32.totalorder %s32, 1
      %p127 = por %p125, %p126
      %p128 = scmp.ne.s32.totalorder %s119, %s120
      %p129 = scmp.eq.s32.totalorder %s32, 0
      %p130 = por %p128, %p129
      %p131 = scmp.ne.s32.totalorder %s119, %s120
      %p132 = scmp.eq.s32.totalorder %s33, 1
      %p133 = por %p131, %p132
      %p135 = scmp.ne.s32.totalorder %s120, %s134
      %p136 = scmp.eq.s32.totalorder %s33, 0
      %p137 = por %p135, %p136
      %s139 = sadd.s32 %s138, 1
      %p142 = scmp.eq.s32.totalorder %s27, 1
      %p143 = scmp.ne.s32.totalorder %s138, %s140
      %p144 = scmp.eq.s32.totalorder %s27, 0
      %p145 = por %p143, %p144
      %p146 = scmp.ne.s32.totalorder %s138, %s140
      %p147 = scmp.eq.s32.totalorder %s32, 1
      %p148 = por %p146, %p147
      %p149 = scmp.ne.s32.totalorder %s140, %s141
      %p150 = scmp.eq.s32.totalorder %s32, 0
      %p151 = por %p149, %p150
      %p152 = scmp.ne.s32.totalorder %s140, %s141
      %p153 = scmp.eq.s32.totalorder %s33, 1
      %p154 = por %p152, %p153
      %p156 = scmp.ne.s32.totalorder %s141, %s155
      %p157 = scmp.eq.s32.totalorder %s33, 0
      %p158 = por %p156, %p157
      %s160 = sadd.s32 %s159, 1
      %p163 = scmp.eq.s32.totalorder %s27, 1
      %p164 = scmp.ne.s32.totalorder %s159, %s161
      %p165 = scmp.eq.s32.totalorder %s27, 0
      %p166 = por %p164, %p165
      %p167 = scmp.ne.s32.totalorder %s159, %s161
      %p168 = scmp.eq.s32.totalorder %s32, 1
      %p169 = por %p167, %p168
      %p170 = scmp.ne.s32.totalorder %s161, %s162
      %p171 = scmp.eq.s32.totalorder %s32, 0
      %p172 = por %p170, %p171
      %p173 = scmp.ne.s32.totalorder %s161, %s162
      %p174 = scmp.eq.s32.totalorder %s33, 1
      %p175 = por %p173, %p174
      %p177 = scmp.ne.s32.totalorder %s162, %s176
      %p178 = scmp.eq.s32.totalorder %s33, 0
      %p179 = por %p177, %p178
      %s181 = sadd.s32 %s180, 1
      %p184 = scmp.eq.s32.totalorder %s27, 1
      %p185 = scmp.ne.s32.totalorder %s180, %s182
      %p186 = scmp.eq.s32.totalorder %s27, 0
      %p187 = por %p185, %p186
      %p188 = scmp.ne.s32.totalorder %s180, %s182
      %p189 = scmp.eq.s32.totalorder %s32, 1
      %p190 = por %p188, %p189
      %p191 = scmp.ne.s32.totalorder %s182, %s183
      %p192 = scmp.eq.s32.totalorder %s32, 0
      %p193 = por %p191, %p192
      %p194 = scmp.ne.s32.totalorder %s182, %s183
      %p195 = scmp.eq.s32.totalorder %s33, 1
      %p196 = por %p194, %p195
      %p198 = scmp.ne.s32.totalorder %s183, %s197
      %p199 = scmp.eq.s32.totalorder %s33, 0
      %p200 = por %p198, %p199
      %s201 = ssub.s32 %s34, %s46
      %s202 = ssub.s32 %s35, %s42
      %s203 = sor.u32 %s201, %s202
      %p204 = scmp.eq.s32.totalorder %s203, 0
      %s206 = sadd.s32 %s205, 1
      %s207 = scalar_select %p204, %s205, %s206
      %p210 = pneg %p204
      %p211 = scmp.eq.s32.totalorder %s27, 1
      %p212 = por %p210, %p211
      %p213 = scmp.ne.s32.totalorder %s205, %s208
      %p214 = scmp.eq.s32.totalorder %s27, 0
      %p215 = por %p213, %p214
      %p216 = scmp.ne.s32.totalorder %s205, %s208
      %p217 = scmp.eq.s32.totalorder %s32, 1
      %p218 = por %p216, %p217
      %p219 = scmp.ne.s32.totalorder %s208, %s209
      %p220 = scmp.eq.s32.totalorder %s32, 0
      %p221 = por %p219, %p220
      %p222 = scmp.ne.s32.totalorder %s208, %s209
      %p223 = scmp.eq.s32.totalorder %s33, 1
      %p224 = por %p222, %p223
      %p226 = scmp.ne.s32.totalorder %s209, %s225
      %p227 = scmp.eq.s32.totalorder %s33, 0
      %p228 = por %p226, %p227
      %s229 = ssub.s32 %s34, %s46
      %s230 = ssub.s32 %s35, %s42
      %s231 = sor.u32 %s229, %s230
      %p232 = scmp.eq.s32.totalorder %s231, 0
      %s234 = sadd.s32 %s233, 1
      %s235 = scalar_select %p232, %s233, %s234
      %p238 = pneg %p232
      %p239 = scmp.eq.s32.totalorder %s27, 1
      %p240 = por %p238, %p239
      %p241 = scmp.ne.s32.totalorder %s233, %s236
      %p242 = scmp.eq.s32.totalorder %s27, 0
      %p243 = por %p241, %p242
      %p244 = scmp.ne.s32.totalorder %s233, %s236
      %p245 = scmp.eq.s32.totalorder %s32, 1
      %p246 = por %p244, %p245
      %p247 = scmp.ne.s32.totalorder %s236, %s237
      %p248 = scmp.eq.s32.totalorder %s32, 0
      %p249 = por %p247, %p248
      %p250 = scmp.ne.s32.totalorder %s236, %s237
      %p251 = scmp.eq.s32.totalorder %s33, 1
      %p252 = por %p250, %p251
      %p254 = scmp.ne.s32.totalorder %s237, %s253
      %p255 = scmp.eq.s32.totalorder %s33, 0
      %p256 = por %p254, %p255
      %s257 = ssub.s32 %s34, %s46
      %s258 = ssub.s32 %s35, %s42
      %s259 = sor.u32 %s257, %s258
      %p260 = scmp.eq.s32.totalorder %s259, 0
      %s262 = sadd.s32 %s261, 1
      %s263 = scalar_select %p260, %s261, %s262
      %p266 = pneg %p260
      %p267 = scmp.eq.s32.totalorder %s27, 1
      %p268 = por %p266, %p267
      %p269 = scmp.ne.s32.totalorder %s261, %s264
      %p270 = scmp.eq.s32.totalorder %s27, 0
      %p271 = por %p269, %p270
      %p272 = scmp.ne.s32.totalorder %s261, %s264
      %p273 = scmp.eq.s32.totalorder %s32, 1
      %p274 = por %p272, %p273
      %p275 = scmp.ne.s32.totalorder %s264, %s265
      %p276 = scmp.eq.s32.totalorder %s32, 0
      %p277 = por %p275, %p276
      %p278 = scmp.ne.s32.totalorder %s264, %s265
      %p279 = scmp.eq.s32.totalorder %s33, 1
      %p280 = por %p278, %p279
      %p282 = scmp.ne.s32.totalorder %s265, %s281
      %p283 = scmp.eq.s32.totalorder %s33, 0
      %p284 = por %p282, %p283
      %p285 = scmp.le.s32.totalorder 1, %s27
      %p286 = scmp.lt.s32.totalorder %s27, 3
      %p287 = pnand %p285, %p286
      %p288 = pneg %p287
      // Predicated region
      $region9: #{tpu_custom_call.1} parent=5 // pred_check
        _
      $region10: #{tpu_custom_call.1} parent=5 // pred_check_branch
        %290 = sbr.rel (%p287) target = $region12
      $region11: #{tpu_custom_call.1} parent=5 // pred_region
        %s291 = ssub.s32 %s27, 1
        // Predicated region
        $region13: #{tpu_custom_call.1} parent=11 // pred_check
          %p292 = pneg %p88
        $region14: #{tpu_custom_call.1} parent=11 // pred_check_branch
          %294 = sbr.rel (%p292) target = $region16
        $region15: #{tpu_custom_call.1} parent=11 // pred_region
          %s296 = ssub.s32 256, 256
          %297 = vsyncadd [#allocation6], %s296
          %s298 = sshll.u32 [#allocation5], 4
          %s299 = int_to_ptr.vmem [resolvable:$true] %s298
          %304 = dma.hbm_to_vmem [thread:$0]  %s1, 256, %s299, [#allocation6], 64, 64, 4
        $region16: #{tpu_custom_call.1} parent=11 // pred_fallthru
          _
        // Predicated region
        $region17: #{tpu_custom_call.1} parent=11 // pred_check
          %p305 = pneg %p109
        $region18: #{tpu_custom_call.1} parent=11 // pred_check_branch
          %307 = sbr.rel (%p305) target = $region20
        $region19: #{tpu_custom_call.1} parent=11 // pred_region
          %s309 = ssub.s32 256, 256
          %310 = vsyncadd [#allocation6], %s309
          %s311 = sshll.u32 [#allocation7], 4
          %s312 = int_to_ptr.vmem [resolvable:$true] %s311
          %317 = dma.hbm_to_vmem [thread:$0]  %s2, 256, %s312, [#allocation6], 64, 64, 4
        $region20: #{tpu_custom_call.1} parent=11 // pred_fallthru
          _
        // Predicated region
        $region21: #{tpu_custom_call.1} parent=11 // pred_check
          %p318 = pneg %p130
        $region22: #{tpu_custom_call.1} parent=11 // pred_check_branch
          %320 = sbr.rel (%p318) target = $region24
        $region23: #{tpu_custom_call.1} parent=11 // pred_region
          %s322 = ssub.s32 256, 256
          %323 = vsyncadd [#allocation9], %s322
          %s324 = sshll.u32 [#allocation8], 4
          %s325 = int_to_ptr.vmem [resolvable:$true] %s324
          %330 = dma.hbm_to_vmem [thread:$0]  %s3, 256, %s325, [#allocation9], 64, 64, 4
        $region24: #{tpu_custom_call.1} parent=11 // pred_fallthru
          _
        // Predicated region
        $region25: #{tpu_custom_call.1} parent=11 // pred_check
          %p331 = pneg %p151
        $region26: #{tpu_custom_call.1} parent=11 // pred_check_branch
          %333 = sbr.rel (%p331) target = $region28
        $region27: #{tpu_custom_call.1} parent=11 // pred_region
          _
        $region28: #{tpu_custom_call.1} parent=11 // pred_fallthru
          _
        // Predicated region
        $region29: #{tpu_custom_call.1} parent=11 // pred_check
          %p334 = pneg %p172
        $region30: #{tpu_custom_call.1} parent=11 // pred_check_branch
          %336 = sbr.rel (%p334) target = $region32
        $region31: #{tpu_custom_call.1} parent=11 // pred_region
          _
        $region32: #{tpu_custom_call.1} parent=11 // pred_fallthru
          _
        // Predicated region
        $region33: #{tpu_custom_call.1} parent=11 // pred_check
          %p337 = pneg %p193
        $region34: #{tpu_custom_call.1} parent=11 // pred_check_branch
          %339 = sbr.rel (%p337) target = $region36
        $region35: #{tpu_custom_call.1} parent=11 // pred_region
          _
        $region36: #{tpu_custom_call.1} parent=11 // pred_fallthru
          _
      $region12: #{tpu_custom_call.1} parent=5 // pred_fallthru
        _
      %p340 = scmp.lt.s32.totalorder %s27, 2
      // Predicated region
      $region37: #{tpu_custom_call.1} parent=5 // pred_check
        %p341 = pneg %p340
      $region38: #{tpu_custom_call.1} parent=5 // pred_check_branch
        %343 = sbr.rel (%p341) target = $region40
      $region39: #{tpu_custom_call.1} parent=5 // pred_region
        // Predicated region
        $region41: #{tpu_custom_call.1} parent=39 // pred_check
          %p344 = pneg %p61
        $region42: #{tpu_custom_call.1} parent=39 // pred_check_branch
          %346 = sbr.rel (%p344) target = $region44
        $region43: #{tpu_custom_call.1} parent=39 // pred_region
          %s347 = sand.u32 %s51, 1
          %s348 = scalar_lea.sflag [#allocation3], %s347
          %s349 = sand.u32 %s51, 1
          %s350 = smul.addr %s349, 4
          %s351 = scalar_lea.vmem [#allocation2], %s350
          %s353 = ssub.s32 64, 64
          %354 = vsyncadd %s348, %s353
          %s355 = sadd.s32 %s35, %s34
          %s356 = smul.addr %s355, 64
          %s357 = scalar_lea.hbm %s0, %s356
          %s359 = sshll.u32 %s351, 4
          %s360 = int_to_ptr.vmem [resolvable:$true] %s359
          %362 = dma.hbm_to_vmem [thread:$0]  %s357, 64, %s360, %s348
        $region44: #{tpu_custom_call.1} parent=39 // pred_fallthru
          _
      $region40: #{tpu_custom_call.1} parent=5 // pred_fallthru
        _
      %p363 = scmp.le.s32.totalorder 1, %s27
      %p364 = scmp.lt.s32.totalorder %s27, 3
      %p365 = pnand %p363, %p364
      %p366 = pneg %p365
      // Predicated region
      $region45: #{tpu_custom_call.1} parent=5 // pred_check
        _
      $region46: #{tpu_custom_call.1} parent=5 // pred_check_branch
        %368 = sbr.rel (%p365) target = $region48
      $region47: #{tpu_custom_call.1} parent=5 // pred_region
        %s369 = ssub.s32 %s27, 1
        %s370 = sand.u32 %s54, 1
        %s371 = scalar_lea.sflag [#allocation3], %s370
        %s372 = sand.u32 %s54, 1
        %s373 = smul.addr %s372, 4
        %s374 = scalar_lea.vmem [#allocation2], %s373
        // Predicated region
        $region49: #{tpu_custom_call.1} parent=47 // pred_check
          %p375 = pneg %p67
        $region50: #{tpu_custom_call.1} parent=47 // pred_check_branch
          %377 = sbr.rel (%p375) target = $region52
        $region51: #{tpu_custom_call.1} parent=47 // pred_region
          %378 = dma.done %s371, 64
        $region52: #{tpu_custom_call.1} parent=47 // pred_fallthru
          _
        // Predicated region
        $region53: #{tpu_custom_call.1} parent=47 // pred_check
          %p379 = pneg %p88
        $region54: #{tpu_custom_call.1} parent=47 // pred_check_branch
          %381 = sbr.rel (%p379) target = $region56
        $region55: #{tpu_custom_call.1} parent=47 // pred_region
          %382 = dma.done [#allocation6], 256
        $region56: #{tpu_custom_call.1} parent=47 // pred_fallthru
          _
        // Predicated region
        $region57: #{tpu_custom_call.1} parent=47 // pred_check
          %p383 = pneg %p109
        $region58: #{tpu_custom_call.1} parent=47 // pred_check_branch
          %385 = sbr.rel (%p383) target = $region60
        $region59: #{tpu_custom_call.1} parent=47 // pred_region
          %386 = dma.done [#allocation6], 256
        $region60: #{tpu_custom_call.1} parent=47 // pred_fallthru
          _
        // Predicated region
        $region61: #{tpu_custom_call.1} parent=47 // pred_check
          %p387 = pneg %p130
        $region62: #{tpu_custom_call.1} parent=47 // pred_check_branch
          %389 = sbr.rel (%p387) target = $region64
        $region63: #{tpu_custom_call.1} parent=47 // pred_region
          %390 = dma.done [#allocation9], 256
        $region64: #{tpu_custom_call.1} parent=47 // pred_fallthru
          _
        %s391 = sand.u32 %s54, 1
        %s392 = scalar_lea.sflag [#allocation3], %s391
        %s393 = sand.u32 %s54, 1
        %s394 = smul.addr %s393, 4
        %s395 = scalar_lea.vmem [#allocation2], %s394
        %p396 = pneg %p67
        %p397 = pneg %p64
        %p398 = pneg %p88
        %p399 = pneg %p85
        %p400 = pneg %p109
        %p401 = pneg %p106
        %p402 = pneg %p130
        %p403 = pneg %p127
        %p404 = pneg %p151
        %p405 = pneg %p148
        %p406 = pneg %p172
        %p407 = pneg %p169
        %p408 = pneg %p193
        %p409 = pneg %p190
        %p410 = pneg %p221
        %p411 = pneg %p218
        %s412 = sand.u32 %s208, 1
        %s413 = scalar_lea.sflag [#allocation4], %s412
        %s414 = sand.u32 %s208, 1
        %s415 = smul.addr %s414, 16
        %s416 = scalar_lea.vmem [#allocation10], %s415
        %p417 = pneg %p249
        %p418 = pneg %p246
        %s419 = sand.u32 %s32, 1
        %s420 = scalar_lea.sflag [#allocation12], %s419
        %s421 = sand.u32 %s236, 1
        %s422 = smul.addr %s421, 16
        %s423 = scalar_lea.vmem [#allocation11], %s422
        %p424 = pneg %p277
        %p425 = pneg %p274
        %s426 = sand.u32 %s32, 1
        %s427 = scalar_lea.sflag [#allocation12], %s426
        %s428 = sand.u32 %s264, 1
        %s429 = smul.addr %s428, 16
        %s430 = scalar_lea.vmem [#allocation13], %s429
        %v432 = vld [vmem:[%s374] sm:$0xf]
        %v433 = vld [vmem:[#allocation5] sm:$0xf]
        %v434 = vld [vmem:[#allocation5 + $0x4] sm:$0xf]
        %v435 = vld [vmem:[#allocation5 + $0x8] sm:$0xf]
        %v436 = vld [vmem:[#allocation5 + $0xc] sm:$0xf]
        %v437 = vld [vmem:[%s4] sm:$0x1]
        %v439 = vlaneseq
        %v440 = vshrl.u32 %v439, 7
        %v441 = vsub.s32 0, %v440
        %v442 = vrot.slane %v437, %v441
        %v448 = vunpack.c.l.b16 %v433
        %v449 = vunpack.c.l.b16 %v434
        %v450 = vunpack.c.l.b16 %v435
        %v451 = vunpack.c.l.b16 %v436
        %v452 = vpack.c.b16 %v449, %v448
        %v453 = vpack.c.b16 %v451, %v450
        %vm456 = vcmask 261120
        %v458 = vsel %vm456, %v432, 0
        %460 = vmatprep.subr.bf16.mxu0 0
        %461 = vmatpush1.bf16.msra.mxu0 0
        %462 = vmatprep.subr.bf16.mxu0 0
        %463 = vmatpush1.bf16.msra.mxu0 0
        %464 = vmatprep.subr.bf16.mxu0 0
        %465 = vmatpush1.bf16.msra.mxu0 0
        %466 = vmatprep.subr.bf16.mxu0 0
        %467 = vmatpush1.bf16.msra.mxu0 0
        %468 = vmatprep.subr.bf16.mxu0 0
        %469 = vmatpush1.bf16.msra.mxu0 0
        %470 = vmatprep.subr.bf16.mxu0 0
        %471 = vmatpush1.bf16.msra.mxu0 0
        %472 = vmatprep.subr.bf16.mxu0 0
        %473 = vmatpush1.bf16.msra.mxu0 %v453
        %474 = vmatprep.subr.bf16.mxu0 0
        %475 = vmatpush1.bf16.msra.mxu0 %v452
        %476 = vmatprep.subr.bf16.mxu0 0
        %477 = vmatpush2.bf16.msra.mxu0 0
        %478 = vmatprep.subr.bf16.mxu0 0
        %479 = vmatpush2.bf16.msra.mxu0 0
        %480 = vmatprep.subr.bf16.mxu0 0
        %481 = vmatpush2.bf16.msra.mxu0 0
        %482 = vmatprep.subr.bf16.mxu0 0
        %483 = vmatpush2.bf16.msra.mxu0 0
        %484 = vmatprep.subr.bf16.mxu0 0
        %485 = vmatpush2.bf16.msra.mxu0 0
        %486 = vmatprep.subr.bf16.mxu0 0
        %487 = vmatpush2.bf16.msra.mxu0 0
        %488 = vmatprep.subr.bf16.mxu0 0
        %489 = vmatpush2.bf16.msra.mxu0 0
        %490 = vmatprep.subr.bf16.mxu0 0
        %491 = vmatpush2.bf16.msra.mxu0 0
        %492 = vmatprep.mubr.bf16.mxu0 0
        %493 = vmatmul.mubr.bf16.gmra.mxu0 %v458
        %v494 = vpop.f32.mrf.mxu0
        %v495 = vadd.f32 %v442, %v494
        %v496 = vpop.f32.mrf.mxu0
        %v497 = vpop.f32.mrf.mxu0
        %v498 = vpop.f32.mrf.mxu0
        %499 = vdwg.mxu0
        %v500 = vpack.c.bf16 %v495, %v495
        %502 = vrot.lane.b32.xlu0 %v500, 120
        %v503 = vpop.permute.xlu0 %502
        %504 = vrot.lane.b32.xlu0 %v500, 112
        %v505 = vpop.permute.xlu0 %504
        %506 = vrot.lane.b32.xlu0 %v500, 104
        %v507 = vpop.permute.xlu0 %506
        %v509 = vunpack.c.l.s4 1983009808
        %v510 = vunpack.c.0.s8 %v509
        %v511 = vlaneseq
        %v512 = vshrl.u32 %v511, 7
        %v513 = vsub.s32 %v510, %v512
        %v514 = vrot.slane %v500, %v513
        %v517 = vunpack.c.l.s4 1983009808
        %v518 = vunpack.c.0.s8 %v517
        %v519 = vlaneseq
        %v520 = vshrl.u32 %v519, 7
        %v521 = vsub.s32 %v518, %v520
        %v522 = vrot.slane %v505, %v521
        %v523 = vcombine.low %v514, %v522
        %v524 = vcombine.high %v514, %v522
        %v526 = vunpack.c.l.s4 1934713408
        %v527 = vunpack.c.0.s8 %v526
        %v528 = vlaneseq
        %v529 = vshrl.u32 %v528, 7
        %v530 = vsub.s32 %v527, %v529
        %v531 = vrot.slane %v523, %v530
        %v533 = vunpack.c.l.s4 1934713408
        %v534 = vunpack.c.0.s8 %v533
        %v535 = vlaneseq
        %v536 = vshrl.u32 %v535, 7
        %v537 = vsub.s32 %v534, %v536
        %v538 = vrot.slane %v524, %v537
        %v539 = vcombine.high %v531, 0
        %v540 = vcombine.high %v538, 0
        %v543 = vunpack.c.l.s4 1983009808
        %v544 = vunpack.c.0.s8 %v543
        %v545 = vlaneseq
        %v546 = vshrl.u32 %v545, 7
        %v547 = vsub.s32 %v544, %v546
        %v548 = vrot.slane %v503, %v547
        %v551 = vunpack.c.l.s4 1983009808
        %v552 = vunpack.c.0.s8 %v551
        %v553 = vlaneseq
        %v554 = vshrl.u32 %v553, 7
        %v555 = vsub.s32 %v552, %v554
        %v556 = vrot.slane %v507, %v555
        %v557 = vcombine.low %v548, %v556
        %v558 = vcombine.high %v548, %v556
        %v560 = vunpack.c.l.s4 1934713408
        %v561 = vunpack.c.0.s8 %v560
        %v562 = vlaneseq
        %v563 = vshrl.u32 %v562, 7
        %v564 = vsub.s32 %v561, %v563
        %v565 = vrot.slane %v557, %v564
        %v567 = vunpack.c.l.s4 1934713408
        %v568 = vunpack.c.0.s8 %v567
        %v569 = vlaneseq
        %v570 = vshrl.u32 %v569, 7
        %v571 = vsub.s32 %v568, %v570
        %v572 = vrot.slane %v558, %v571
        %v573 = vcombine.high %v565, 0
        %v574 = vcombine.high %v572, 0
        %v577 = vpack.i.b16 %v565, %v531
        %v579 = vshrl.u32 %v531, 16
        %v580 = vshrl.u32 %v565, 16
        %v581 = vpack.i.b16 %v580, %v579
        %v585 = vpack.i.b16 %v573, %v539
        %v587 = vshrl.u32 %v539, 16
        %v588 = vshrl.u32 %v573, 16
        %v589 = vpack.i.b16 %v588, %v587
        %v593 = vpack.i.b16 %v572, %v538
        %v595 = vshrl.u32 %v538, 16
        %v596 = vshrl.u32 %v572, 16
        %v597 = vpack.i.b16 %v596, %v595
        %v601 = vpack.i.b16 %v574, %v540
        %v603 = vshrl.u32 %v540, 16
        %v604 = vshrl.u32 %v574, 16
        %v605 = vpack.i.b16 %v604, %v603
        %v607 = vcombine.low %v577, %v593
        %v609 = vunpack.c.l.s4 1983009808
        %v610 = vunpack.c.0.s8 %v609
        %v611 = vlaneseq
        %v612 = vshrl.u32 %v611, 7
        %v613 = vsub.s32 %v610, %v612
        %v614 = vrot.slane %v607, %v613
        %v615 = vcombine.low %v585, %v601
        %v617 = vunpack.c.l.s4 1983009808
        %v618 = vunpack.c.0.s8 %v617
        %v619 = vlaneseq
        %v620 = vshrl.u32 %v619, 7
        %v621 = vsub.s32 %v618, %v620
        %v622 = vrot.slane %v615, %v621
        %v623 = vcombine.low %v614, %v622
        %v625 = vunpack.c.l.s4 1934713408
        %v626 = vunpack.c.0.s8 %v625
        %v627 = vlaneseq
        %v628 = vshrl.u32 %v627, 7
        %v629 = vsub.s32 %v626, %v628
        %v630 = vrot.slane %v623, %v629
        %v631 = vcombine.high %v630, 0
        %v632 = vcombine.low %v581, %v597
        %v634 = vunpack.c.l.s4 1983009808
        %v635 = vunpack.c.0.s8 %v634
        %v636 = vlaneseq
        %v637 = vshrl.u32 %v636, 7
        %v638 = vsub.s32 %v635, %v637
        %v639 = vrot.slane %v632, %v638
        %v640 = vcombine.low %v589, %v605
        %v642 = vunpack.c.l.s4 1983009808
        %v643 = vunpack.c.0.s8 %v642
        %v644 = vlaneseq
        %v645 = vshrl.u32 %v644, 7
        %v646 = vsub.s32 %v643, %v645
        %v647 = vrot.slane %v640, %v646
        %v648 = vcombine.low %v639, %v647
        %v650 = vunpack.c.l.s4 1934713408
        %v651 = vunpack.c.0.s8 %v650
        %v652 = vlaneseq
        %v653 = vshrl.u32 %v652, 7
        %v654 = vsub.s32 %v651, %v653
        %v655 = vrot.slane %v648, %v654
        %v656 = vcombine.high %v655, 0
        %v659 = vpack.i.b16 %v655, %v630
        %v661 = vshrl.u32 %v630, 16
        %v662 = vshrl.u32 %v655, 16
        %v663 = vpack.i.b16 %v662, %v661
        %v667 = vpack.i.b16 %v656, %v631
        %v669 = vshrl.u32 %v631, 16
        %v670 = vshrl.u32 %v656, 16
        %v671 = vpack.i.b16 %v670, %v669
        %vm673 = vcmask 60416
        %674 = vst.msk [vmem:[%s416] sm:$0xf] %vm673, %v659
        %675 = vst.msk [vmem:[%s416 + $0x4] sm:$0xf] %vm673, %v663
        %676 = vst.msk [vmem:[%s416 + $0x8] sm:$0xf] %vm673, %v667
        %677 = vst.msk [vmem:[%s416 + $0xc] sm:$0xf] %vm673, %v671
        %v678 = vld [vmem:[#allocation7] sm:$0xf]
        %v679 = vld [vmem:[#allocation7 + $0x4] sm:$0xf]
        %v680 = vld [vmem:[#allocation7 + $0x8] sm:$0xf]
        %v681 = vld [vmem:[#allocation7 + $0xc] sm:$0xf]
        %v682 = vld [vmem:[%s5] sm:$0x1]
        %v684 = vlaneseq
        %v685 = vshrl.u32 %v684, 7
        %v686 = vsub.s32 0, %v685
        %v687 = vrot.slane %v682, %v686
        %v693 = vunpack.c.l.b16 %v678
        %v694 = vunpack.c.l.b16 %v679
        %v695 = vunpack.c.l.b16 %v680
        %v696 = vunpack.c.l.b16 %v681
        %v697 = vpack.c.b16 %v694, %v693
        %v698 = vpack.c.b16 %v696, %v695
        %701 = vmatprep.subr.bf16.mxu0 0
        %702 = vmatpush1.bf16.msra.mxu0 0
        %703 = vmatprep.subr.bf16.mxu0 0
        %704 = vmatpush1.bf16.msra.mxu0 0
        %705 = vmatprep.subr.bf16.mxu0 0
        %706 = vmatpush1.bf16.msra.mxu0 0
        %707 = vmatprep.subr.bf16.mxu0 0
        %708 = vmatpush1.bf16.msra.mxu0 0
        %709 = vmatprep.subr.bf16.mxu0 0
        %710 = vmatpush1.bf16.msra.mxu0 0
        %711 = vmatprep.subr.bf16.mxu0 0
        %712 = vmatpush1.bf16.msra.mxu0 0
        %713 = vmatprep.subr.bf16.mxu0 0
        %714 = vmatpush1.bf16.msra.mxu0 %v698
        %715 = vmatprep.subr.bf16.mxu0 0
        %716 = vmatpush1.bf16.msra.mxu0 %v697
        %717 = vmatprep.subr.bf16.mxu0 0
        %718 = vmatpush2.bf16.msra.mxu0 0
        %719 = vmatprep.subr.bf16.mxu0 0
        %720 = vmatpush2.bf16.msra.mxu0 0
        %721 = vmatprep.subr.bf16.mxu0 0
        %722 = vmatpush2.bf16.msra.mxu0 0
        %723 = vmatprep.subr.bf16.mxu0 0
        %724 = vmatpush2.bf16.msra.mxu0 0
        %725 = vmatprep.subr.bf16.mxu0 0
        %726 = vmatpush2.bf16.msra.mxu0 0
        %727 = vmatprep.subr.bf16.mxu0 0
        %728 = vmatpush2.bf16.msra.mxu0 0
        %729 = vmatprep.subr.bf16.mxu0 0
        %730 = vmatpush2.bf16.msra.mxu0 0
        %731 = vmatprep.subr.bf16.mxu0 0
        %732 = vmatpush2.bf16.msra.mxu0 0
        %733 = vmatprep.mubr.bf16.mxu0 0
        %734 = vmatmul.mubr.bf16.gmra.mxu0 %v458
        %v735 = vpop.f32.mrf.mxu0
        %v736 = vadd.f32 %v687, %v735
        %v737 = vpop.f32.mrf.mxu0
        %v738 = vpop.f32.mrf.mxu0
        %v739 = vpop.f32.mrf.mxu0
        %740 = vdwg.mxu0
        %v741 = vpack.c.bf16 %v736, %v736
        %743 = vrot.lane.b32.xlu0 %v741, 120
        %v744 = vpop.permute.xlu0 %743
        %745 = vrot.lane.b32.xlu0 %v741, 112
        %v746 = vpop.permute.xlu0 %745
        %747 = vrot.lane.b32.xlu0 %v741, 104
        %v748 = vpop.permute.xlu0 %747
        %v750 = vunpack.c.l.s4 1983009808
        %v751 = vunpack.c.0.s8 %v750
        %v752 = vlaneseq
        %v753 = vshrl.u32 %v752, 7
        %v754 = vsub.s32 %v751, %v753
        %v755 = vrot.slane %v741, %v754
        %v758 = vunpack.c.l.s4 1983009808
        %v759 = vunpack.c.0.s8 %v758
        %v760 = vlaneseq
        %v761 = vshrl.u32 %v760, 7
        %v762 = vsub.s32 %v759, %v761
        %v763 = vrot.slane %v746, %v762
        %v764 = vcombine.low %v755, %v763
        %v765 = vcombine.high %v755, %v763
        %v767 = vunpack.c.l.s4 1934713408
        %v768 = vunpack.c.0.s8 %v767
        %v769 = vlaneseq
        %v770 = vshrl.u32 %v769, 7
        %v771 = vsub.s32 %v768, %v770
        %v772 = vrot.slane %v764, %v771
        %v774 = vunpack.c.l.s4 1934713408
        %v775 = vunpack.c.0.s8 %v774
        %v776 = vlaneseq
        %v777 = vshrl.u32 %v776, 7
        %v778 = vsub.s32 %v775, %v777
        %v779 = vrot.slane %v765, %v778
        %v780 = vcombine.high %v772, 0
        %v781 = vcombine.high %v779, 0
        %v784 = vunpack.c.l.s4 1983009808
        %v785 = vunpack.c.0.s8 %v784
        %v786 = vlaneseq
        %v787 = vshrl.u32 %v786, 7
        %v788 = vsub.s32 %v785, %v787
        %v789 = vrot.slane %v744, %v788
        %v792 = vunpack.c.l.s4 1983009808
        %v793 = vunpack.c.0.s8 %v792
        %v794 = vlaneseq
        %v795 = vshrl.u32 %v794, 7
        %v796 = vsub.s32 %v793, %v795
        %v797 = vrot.slane %v748, %v796
        %v798 = vcombine.low %v789, %v797
        %v799 = vcombine.high %v789, %v797
        %v801 = vunpack.c.l.s4 1934713408
        %v802 = vunpack.c.0.s8 %v801
        %v803 = vlaneseq
        %v804 = vshrl.u32 %v803, 7
        %v805 = vsub.s32 %v802, %v804
        %v806 = vrot.slane %v798, %v805
        %v808 = vunpack.c.l.s4 1934713408
        %v809 = vunpack.c.0.s8 %v808
        %v810 = vlaneseq
        %v811 = vshrl.u32 %v810, 7
        %v812 = vsub.s32 %v809, %v811
        %v813 = vrot.slane %v799, %v812
        %v814 = vcombine.high %v806, 0
        %v815 = vcombine.high %v813, 0
        %v818 = vpack.i.b16 %v806, %v772
        %v820 = vshrl.u32 %v772, 16
        %v821 = vshrl.u32 %v806, 16
        %v822 = vpack.i.b16 %v821, %v820
        %v826 = vpack.i.b16 %v814, %v780
        %v828 = vshrl.u32 %v780, 16
        %v829 = vshrl.u32 %v814, 16
        %v830 = vpack.i.b16 %v829, %v828
        %v834 = vpack.i.b16 %v813, %v779
        %v836 = vshrl.u32 %v779, 16
        %v837 = vshrl.u32 %v813, 16
        %v838 = vpack.i.b16 %v837, %v836
        %v842 = vpack.i.b16 %v815, %v781
        %v844 = vshrl.u32 %v781, 16
        %v845 = vshrl.u32 %v815, 16
        %v846 = vpack.i.b16 %v845, %v844
        %v848 = vcombine.low %v818, %v834
        %v850 = vunpack.c.l.s4 1983009808
        %v851 = vunpack.c.0.s8 %v850
        %v852 = vlaneseq
        %v853 = vshrl.u32 %v852, 7
        %v854 = vsub.s32 %v851, %v853
        %v855 = vrot.slane %v848, %v854
        %v856 = vcombine.low %v826, %v842
        %v858 = vunpack.c.l.s4 1983009808
        %v859 = vunpack.c.0.s8 %v858
        %v860 = vlaneseq
        %v861 = vshrl.u32 %v860, 7
        %v862 = vsub.s32 %v859, %v861
        %v863 = vrot.slane %v856, %v862
        %v864 = vcombine.low %v855, %v863
        %v866 = vunpack.c.l.s4 1934713408
        %v867 = vunpack.c.0.s8 %v866
        %v868 = vlaneseq
        %v869 = vshrl.u32 %v868, 7
        %v870 = vsub.s32 %v867, %v869
        %v871 = vrot.slane %v864, %v870
        %v872 = vcombine.high %v871, 0
        %v873 = vcombine.low %v822, %v838
        %v875 = vunpack.c.l.s4 1983009808
        %v876 = vunpack.c.0.s8 %v875
        %v877 = vlaneseq
        %v878 = vshrl.u32 %v877, 7
        %v879 = vsub.s32 %v876, %v878
        %v880 = vrot.slane %v873, %v879
        %v881 = vcombine.low %v830, %v846
        %v883 = vunpack.c.l.s4 1983009808
        %v884 = vunpack.c.0.s8 %v883
        %v885 = vlaneseq
        %v886 = vshrl.u32 %v885, 7
        %v887 = vsub.s32 %v884, %v886
        %v888 = vrot.slane %v881, %v887
        %v889 = vcombine.low %v880, %v888
        %v891 = vunpack.c.l.s4 1934713408
        %v892 = vunpack.c.0.s8 %v891
        %v893 = vlaneseq
        %v894 = vshrl.u32 %v893, 7
        %v895 = vsub.s32 %v892, %v894
        %v896 = vrot.slane %v889, %v895
        %v897 = vcombine.high %v896, 0
        %v900 = vpack.i.b16 %v896, %v871
        %v902 = vshrl.u32 %v871, 16
        %v903 = vshrl.u32 %v896, 16
        %v904 = vpack.i.b16 %v903, %v902
        %v908 = vpack.i.b16 %v897, %v872
        %v910 = vshrl.u32 %v872, 16
        %v911 = vshrl.u32 %v897, 16
        %v912 = vpack.i.b16 %v911, %v910
        %914 = vst.msk [vmem:[%s423] sm:$0xf] %vm673, %v900
        %915 = vst.msk [vmem:[%s423 + $0x4] sm:$0xf] %vm673, %v904
        %916 = vst.msk [vmem:[%s423 + $0x8] sm:$0xf] %vm673, %v908
        %917 = vst.msk [vmem:[%s423 + $0xc] sm:$0xf] %vm673, %v912
        %v918 = vld [vmem:[#allocation8] sm:$0xf]
        %v919 = vld [vmem:[#allocation8 + $0x4] sm:$0xf]
        %v920 = vld [vmem:[#allocation8 + $0x8] sm:$0xf]
        %v921 = vld [vmem:[#allocation8 + $0xc] sm:$0xf]
        %v922 = vld [vmem:[%s6] sm:$0x1]
        %v924 = vlaneseq
        %v925 = vshrl.u32 %v924, 7
        %v926 = vsub.s32 0, %v925
        %v927 = vrot.slane %v922, %v926
        %v933 = vunpack.c.l.b16 %v918
        %v934 = vunpack.c.l.b16 %v919
        %v935 = vunpack.c.l.b16 %v920
        %v936 = vunpack.c.l.b16 %v921
        %v937 = vpack.c.b16 %v934, %v933
        %v938 = vpack.c.b16 %v936, %v935
        %941 = vmatprep.subr.bf16.mxu0 0
        %942 = vmatpush1.bf16.msra.mxu0 0
        %943 = vmatprep.subr.bf16.mxu0 0
        %944 = vmatpush1.bf16.msra.mxu0 0
        %945 = vmatprep.subr.bf16.mxu0 0
        %946 = vmatpush1.bf16.msra.mxu0 0
        %947 = vmatprep.subr.bf16.mxu0 0
        %948 = vmatpush1.bf16.msra.mxu0 0
        %949 = vmatprep.subr.bf16.mxu0 0
        %950 = vmatpush1.bf16.msra.mxu0 0
        %951 = vmatprep.subr.bf16.mxu0 0
        %952 = vmatpush1.bf16.msra.mxu0 0
        %953 = vmatprep.subr.bf16.mxu0 0
        %954 = vmatpush1.bf16.msra.mxu0 %v938
        %955 = vmatprep.subr.bf16.mxu0 0
        %956 = vmatpush1.bf16.msra.mxu0 %v937
        %957 = vmatprep.subr.bf16.mxu0 0
        %958 = vmatpush2.bf16.msra.mxu0 0
        %959 = vmatprep.subr.bf16.mxu0 0
        %960 = vmatpush2.bf16.msra.mxu0 0
        %961 = vmatprep.subr.bf16.mxu0 0
        %962 = vmatpush2.bf16.msra.mxu0 0
        %963 = vmatprep.subr.bf16.mxu0 0
        %964 = vmatpush2.bf16.msra.mxu0 0
        %965 = vmatprep.subr.bf16.mxu0 0
        %966 = vmatpush2.bf16.msra.mxu0 0
        %967 = vmatprep.subr.bf16.mxu0 0
        %968 = vmatpush2.bf16.msra.mxu0 0
        %969 = vmatprep.subr.bf16.mxu0 0
        %970 = vmatpush2.bf16.msra.mxu0 0
        %971 = vmatprep.subr.bf16.mxu0 0
        %972 = vmatpush2.bf16.msra.mxu0 0
        %973 = vmatprep.mubr.bf16.mxu0 0
        %974 = vmatmul.mubr.bf16.gmra.mxu0 %v458
        %v975 = vpop.f32.mrf.mxu0
        %v976 = vadd.f32 %v927, %v975
        %v977 = vpop.f32.mrf.mxu0
        %v978 = vpop.f32.mrf.mxu0
        %v979 = vpop.f32.mrf.mxu0
        %980 = vdwg.mxu0
        %v981 = vpack.c.bf16 %v976, %v976
        %983 = vrot.lane.b32.xlu0 %v981, 120
        %v984 = vpop.permute.xlu0 %983
        %985 = vrot.lane.b32.xlu0 %v981, 112
        %v986 = vpop.permute.xlu0 %985
        %987 = vrot.lane.b32.xlu0 %v981, 104
        %v988 = vpop.permute.xlu0 %987
        %v990 = vunpack.c.l.s4 1983009808
        %v991 = vunpack.c.0.s8 %v990
        %v992 = vlaneseq
        %v993 = vshrl.u32 %v992, 7
        %v994 = vsub.s32 %v991, %v993
        %v995 = vrot.slane %v981, %v994
        %v998 = vunpack.c.l.s4 1983009808
        %v999 = vunpack.c.0.s8 %v998
        %v1000 = vlaneseq
        %v1001 = vshrl.u32 %v1000, 7
        %v1002 = vsub.s32 %v999, %v1001
        %v1003 = vrot.slane %v986, %v1002
        %v1004 = vcombine.low %v995, %v1003
        %v1005 = vcombine.high %v995, %v1003
        %v1007 = vunpack.c.l.s4 1934713408
        %v1008 = vunpack.c.0.s8 %v1007
        %v1009 = vlaneseq
        %v1010 = vshrl.u32 %v1009, 7
        %v1011 = vsub.s32 %v1008, %v1010
        %v1012 = vrot.slane %v1004, %v1011
        %v1014 = vunpack.c.l.s4 1934713408
        %v1015 = vunpack.c.0.s8 %v1014
        %v1016 = vlaneseq
        %v1017 = vshrl.u32 %v1016, 7
        %v1018 = vsub.s32 %v1015, %v1017
        %v1019 = vrot.slane %v1005, %v1018
        %v1020 = vcombine.high %v1012, 0
        %v1021 = vcombine.high %v1019, 0
        %v1024 = vunpack.c.l.s4 1983009808
        %v1025 = vunpack.c.0.s8 %v1024
        %v1026 = vlaneseq
        %v1027 = vshrl.u32 %v1026, 7
        %v1028 = vsub.s32 %v1025, %v1027
        %v1029 = vrot.slane %v984, %v1028
        %v1032 = vunpack.c.l.s4 1983009808
        %v1033 = vunpack.c.0.s8 %v1032
        %v1034 = vlaneseq
        %v1035 = vshrl.u32 %v1034, 7
        %v1036 = vsub.s32 %v1033, %v1035
        %v1037 = vrot.slane %v988, %v1036
        %v1038 = vcombine.low %v1029, %v1037
        %v1039 = vcombine.high %v1029, %v1037
        %v1041 = vunpack.c.l.s4 1934713408
        %v1042 = vunpack.c.0.s8 %v1041
        %v1043 = vlaneseq
        %v1044 = vshrl.u32 %v1043, 7
        %v1045 = vsub.s32 %v1042, %v1044
        %v1046 = vrot.slane %v1038, %v1045
        %v1048 = vunpack.c.l.s4 1934713408
        %v1049 = vunpack.c.0.s8 %v1048
        %v1050 = vlaneseq
        %v1051 = vshrl.u32 %v1050, 7
        %v1052 = vsub.s32 %v1049, %v1051
        %v1053 = vrot.slane %v1039, %v1052
        %v1054 = vcombine.high %v1046, 0
        %v1055 = vcombine.high %v1053, 0
        %v1058 = vpack.i.b16 %v1046, %v1012
        %v1060 = vshrl.u32 %v1012, 16
        %v1061 = vshrl.u32 %v1046, 16
        %v1062 = vpack.i.b16 %v1061, %v1060
        %v1066 = vpack.i.b16 %v1054, %v1020
        %v1068 = vshrl.u32 %v1020, 16
        %v1069 = vshrl.u32 %v1054, 16
        %v1070 = vpack.i.b16 %v1069, %v1068
        %v1074 = vpack.i.b16 %v1053, %v1019
        %v1076 = vshrl.u32 %v1019, 16
        %v1077 = vshrl.u32 %v1053, 16
        %v1078 = vpack.i.b16 %v1077, %v1076
        %v1082 = vpack.i.b16 %v1055, %v1021
        %v1084 = vshrl.u32 %v1021, 16
        %v1085 = vshrl.u32 %v1055, 16
        %v1086 = vpack.i.b16 %v1085, %v1084
        %v1088 = vcombine.low %v1058, %v1074
        %v1090 = vunpack.c.l.s4 1983009808
        %v1091 = vunpack.c.0.s8 %v1090
        %v1092 = vlaneseq
        %v1093 = vshrl.u32 %v1092, 7
        %v1094 = vsub.s32 %v1091, %v1093
        %v1095 = vrot.slane %v1088, %v1094
        %v1096 = vcombine.low %v1066, %v1082
        %v1098 = vunpack.c.l.s4 1983009808
        %v1099 = vunpack.c.0.s8 %v1098
        %v1100 = vlaneseq
        %v1101 = vshrl.u32 %v1100, 7
        %v1102 = vsub.s32 %v1099, %v1101
        %v1103 = vrot.slane %v1096, %v1102
        %v1104 = vcombine.low %v1095, %v1103
        %v1106 = vunpack.c.l.s4 1934713408
        %v1107 = vunpack.c.0.s8 %v1106
        %v1108 = vlaneseq
        %v1109 = vshrl.u32 %v1108, 7
        %v1110 = vsub.s32 %v1107, %v1109
        %v1111 = vrot.slane %v1104, %v1110
        %v1112 = vcombine.high %v1111, 0
        %v1113 = vcombine.low %v1062, %v1078
        %v1115 = vunpack.c.l.s4 1983009808
        %v1116 = vunpack.c.0.s8 %v1115
        %v1117 = vlaneseq
        %v1118 = vshrl.u32 %v1117, 7
        %v1119 = vsub.s32 %v1116, %v1118
        %v1120 = vrot.slane %v1113, %v1119
        %v1121 = vcombine.low %v1070, %v1086
        %v1123 = vunpack.c.l.s4 1983009808
        %v1124 = vunpack.c.0.s8 %v1123
        %v1125 = vlaneseq
        %v1126 = vshrl.u32 %v1125, 7
        %v1127 = vsub.s32 %v1124, %v1126
        %v1128 = vrot.slane %v1121, %v1127
        %v1129 = vcombine.low %v1120, %v1128
        %v1131 = vunpack.c.l.s4 1934713408
        %v1132 = vunpack.c.0.s8 %v1131
        %v1133 = vlaneseq
        %v1134 = vshrl.u32 %v1133, 7
        %v1135 = vsub.s32 %v1132, %v1134
        %v1136 = vrot.slane %v1129, %v1135
        %v1137 = vcombine.high %v1136, 0
        %v1140 = vpack.i.b16 %v1136, %v1111
        %v1142 = vshrl.u32 %v1111, 16
        %v1143 = vshrl.u32 %v1136, 16
        %v1144 = vpack.i.b16 %v1143, %v1142
        %v1148 = vpack.i.b16 %v1137, %v1112
        %v1150 = vshrl.u32 %v1112, 16
        %v1151 = vshrl.u32 %v1137, 16
        %v1152 = vpack.i.b16 %v1151, %v1150
        %1154 = vst.msk [vmem:[%s430] sm:$0xf] %vm673, %v1140
        %1155 = vst.msk [vmem:[%s430 + $0x4] sm:$0xf] %vm673, %v1144
        %1156 = vst.msk [vmem:[%s430 + $0x8] sm:$0xf] %vm673, %v1148
        %1157 = vst.msk [vmem:[%s430 + $0xc] sm:$0xf] %vm673, %v1152
        %s1158 = sand.u32 %s208, 1
        %s1159 = scalar_lea.sflag [#allocation4], %s1158
        %s1160 = sand.u32 %s208, 1
        %s1161 = smul.addr %s1160, 16
        %s1162 = scalar_lea.vmem [#allocation10], %s1161
        %s1163 = sand.u32 %s32, 1
        %s1164 = scalar_lea.sflag [#allocation12], %s1163
        %s1165 = sand.u32 %s236, 1
        %s1166 = smul.addr %s1165, 16
        %s1167 = scalar_lea.vmem [#allocation11], %s1166
        %s1168 = sand.u32 %s32, 1
        %s1169 = scalar_lea.sflag [#allocation12], %s1168
        %s1170 = sand.u32 %s264, 1
        %s1171 = smul.addr %s1170, 16
        %s1172 = scalar_lea.vmem [#allocation13], %s1171
        // Predicated region
        $region65: #{tpu_custom_call.1} parent=47 // pred_check
          %p1173 = pneg %p218
        $region66: #{tpu_custom_call.1} parent=47 // pred_check_branch
          %1175 = sbr.rel (%p1173) target = $region68
        $region67: #{tpu_custom_call.1} parent=47 // pred_region
          %s1177 = ssub.s32 256, 256
          %1178 = vsyncadd %s1159, %s1177
          %s1179 = smul.addr %s36, 4
          %s1180 = sadd.s32 %s37, %s1179
          %s1181 = smul.addr %s1180, 64
          %s1182 = scalar_lea.hbm %s7, %s1181
          %s1183 = sshll.u32 %s1162, 4
          %s1184 = int_to_ptr.vmem [resolvable:$true] %s1183
          %1189 = dma.vmem_to_hbm [thread:$0]  %s1184, 256, %s1182, %s1159, 64, 64, 4
        $region68: #{tpu_custom_call.1} parent=47 // pred_fallthru
          _
        // Predicated region
        $region69: #{tpu_custom_call.1} parent=47 // pred_check
          %p1190 = pneg %p246
        $region70: #{tpu_custom_call.1} parent=47 // pred_check_branch
          %1192 = sbr.rel (%p1190) target = $region72
        $region71: #{tpu_custom_call.1} parent=47 // pred_region
          %s1194 = ssub.s32 256, 256
          %1195 = vsyncadd %s1164, %s1194
          %s1196 = smul.addr %s36, 4
          %s1197 = sadd.s32 %s37, %s1196
          %s1198 = smul.addr %s1197, 64
          %s1199 = scalar_lea.hbm %s8, %s1198
          %s1200 = sshll.u32 %s1167, 4
          %s1201 = int_to_ptr.vmem [resolvable:$true] %s1200
          %1206 = dma.vmem_to_hbm [thread:$0]  %s1201, 256, %s1199, %s1164, 64, 64, 4
        $region72: #{tpu_custom_call.1} parent=47 // pred_fallthru
          _
        // Predicated region
        $region73: #{tpu_custom_call.1} parent=47 // pred_check
          %p1207 = pneg %p274
        $region74: #{tpu_custom_call.1} parent=47 // pred_check_branch
          %1209 = sbr.rel (%p1207) target = $region76
        $region75: #{tpu_custom_call.1} parent=47 // pred_region
          %s1211 = ssub.s32 256, 256
          %1212 = vsyncadd %s1169, %s1211
          %s1213 = smul.addr %s36, 4
          %s1214 = sadd.s32 %s37, %s1213
          %s1215 = smul.addr %s1214, 64
          %s1216 = scalar_lea.hbm %s9, %s1215
          %s1217 = sshll.u32 %s1172, 4
          %s1218 = int_to_ptr.vmem [resolvable:$true] %s1217
          %1223 = dma.vmem_to_hbm [thread:$0]  %s1218, 256, %s1216, %s1169, 64, 64, 4
        $region76: #{tpu_custom_call.1} parent=47 // pred_fallthru
          _
      $region48: #{tpu_custom_call.1} parent=5 // pred_fallthru
        _
      %p1224 = scmp.le.s32.totalorder 2, %s27
      // Predicated region
      $region77: #{tpu_custom_call.1} parent=5 // pred_check
        %p1225 = pneg %p1224
      $region78: #{tpu_custom_call.1} parent=5 // pred_check_branch
        %1227 = sbr.rel (%p1225) target = $region80
      $region79: #{tpu_custom_call.1} parent=5 // pred_region
        %s1228 = ssub.s32 %s27, 2
        // Predicated region
        $region81: #{tpu_custom_call.1} parent=79 // pred_check
          %p1229 = pneg %p224
        $region82: #{tpu_custom_call.1} parent=79 // pred_check_branch
          %1231 = sbr.rel (%p1229) target = $region84
        $region83: #{tpu_custom_call.1} parent=79 // pred_region
          %s1232 = sand.u32 %s209, 1
          %s1233 = scalar_lea.sflag [#allocation4], %s1232
          %s1234 = sand.u32 %s209, 1
          %s1235 = smul.addr %s1234, 16
          %s1236 = scalar_lea.vmem [#allocation10], %s1235
          %1237 = dma.done %s1233, 256
        $region84: #{tpu_custom_call.1} parent=79 // pred_fallthru
          _
        // Predicated region
        $region85: #{tpu_custom_call.1} parent=79 // pred_check
          %p1238 = pneg %p252
        $region86: #{tpu_custom_call.1} parent=79 // pred_check_branch
          %1240 = sbr.rel (%p1238) target = $region88
        $region87: #{tpu_custom_call.1} parent=79 // pred_region
          %s1241 = sand.u32 %s33, 1
          %s1242 = scalar_lea.sflag [#allocation12], %s1241
          %s1243 = sand.u32 %s237, 1
          %s1244 = smul.addr %s1243, 16
          %s1245 = scalar_lea.vmem [#allocation11], %s1244
          %1246 = dma.done %s1242, 256
        $region88: #{tpu_custom_call.1} parent=79 // pred_fallthru
          _
        // Predicated region
        $region89: #{tpu_custom_call.1} parent=79 // pred_check
          %p1247 = pneg %p280
        $region90: #{tpu_custom_call.1} parent=79 // pred_check_branch
          %1249 = sbr.rel (%p1247) target = $region92
        $region91: #{tpu_custom_call.1} parent=79 // pred_region
          %s1250 = sand.u32 %s33, 1
          %s1251 = scalar_lea.sflag [#allocation12], %s1250
          %s1252 = sand.u32 %s265, 1
          %s1253 = smul.addr %s1252, 16
          %s1254 = scalar_lea.vmem [#allocation13], %s1253
          %1255 = dma.done %s1251, 256
        $region92: #{tpu_custom_call.1} parent=79 // pred_fallthru
          _
      $region80: #{tpu_custom_call.1} parent=5 // pred_fallthru
        _
    $region6: #{tpu_custom_call.1} parent=1 // loop_footer
      %s31 = sadd.s32 1, %s27
    $region7: #{tpu_custom_call.1} parent=1 // loop_footer_branch
      %26 = sbr.rel target = $region3
    $region8: #{tpu_custom_call.1} parent=1 // loop_exit
      _
    %1256 = vsyncpa [#allocation3], 1
    %s1257 = scalar_lea.sflag [#allocation3], 1
    %1258 = vsyncpa %s1257, 1
    %1259 = vsyncpa [#allocation6], 1
    %1260 = vsyncpa [#allocation9], 1
    %1261 = vsyncpa [#allocation4], 1
    %s1262 = scalar_lea.sflag [#allocation4], 1
    %1263 = vsyncpa %s1262, 1
    %1264 = vsyncpa [#allocation12], 1
    %s1265 = scalar_lea.sflag [#allocation12], 1
    %1266 = vsyncpa %s1265, 1

</llo_original>
